<compile_context>
chip_gen: v7x
topology: tpu7x:2x2x1
jax: 0.10.0
libtpu: 0.0.40
codegen_flags: <defaults>
</compile_context>

<pallas_src>
import functools

import jax
import jax.numpy as jnp
from jax.experimental import pallas as pl
from jax.experimental.pallas import tpu as pltpu

_F_PAD = 128  # feature lane padding (hidden = 16 -> lane-dense 128-wide stores)


def _pad2(arr, rows, cols):
    r, c = arr.shape
    return jnp.pad(arr, ((0, rows - r), (0, cols - c)))


# ---------------------------------------------------------------------------
# Fused path: both GCN layers in a single kernel, A_hat fully VMEM-resident.
# ---------------------------------------------------------------------------
def _fused_kernel(a_ref, xw1_ref, b1_ref, o_ref):
    a = a_ref[...]                                                 # (Np, Np) bf16
    h = jnp.dot(a, xw1_ref[...], preferred_element_type=jnp.float32)
    h = jnp.maximum(h + b1_ref[...], 0.0).astype(jnp.bfloat16)     # layer-1 act
    o_ref[...] = jnp.dot(a, h, preferred_element_type=jnp.float32)  # A @ H (f32)


def _fused_two_layer(a_p, xw1_p, b1_p):
    n_pad, f_pad = xw1_p.shape
    # No grid: whole (small) operands live in VMEM; A is DMA'd from HBM once.
    return pl.pallas_call(
        _fused_kernel,
        out_shape=jax.ShapeDtypeStruct((n_pad, f_pad), jnp.float32),
    )(a_p, xw1_p, b1_p)


# ---------------------------------------------------------------------------
# Tiled path: act(A @ Y + b); Y stays VMEM-resident, A row panels stream.
# ---------------------------------------------------------------------------
def _agg_kernel(a_ref, y_ref, b_ref, o_ref, acc_ref, *, tk, apply_relu):
    k = pl.program_id(1)

    @pl.when(k == 0)
    def _():
        acc_ref[...] = jnp.zeros_like(acc_ref)

    koff = pl.multiple_of(k * tk, tk)
    # bf16 x bf16 -> f32 accumulate on the MXU; Y sliced from the resident panel.
    acc_ref[...] += jnp.dot(a_ref[...], y_ref[pl.ds(koff, tk), :],
                            preferred_element_type=jnp.float32)

    @pl.when(k == pl.num_programs(1) - 1)
    def _():
        r = acc_ref[...] + b_ref[...]            # bias add only in finalize
        if apply_relu:
            r = jnp.maximum(r, 0.0)
        o_ref[...] = r.astype(o_ref.dtype)       # lane-dense (tm, 128) store


def _tiled_aggregate(a_p, y_p, bias_p, *, relu, out_dtype):
    n_pad, f_pad = y_p.shape
    assert n_pad % 256 == 0
    # Row tile: 256 keeps >= 2 tiles on the 'parallel' axis (v7x megacore)
    # whenever n_pad >= 512.
    tm = min(256, n_pad)
    # K tile: as large as possible, multiple of 256, dividing n_pad.
    if n_pad % 1024 == 0:
        tk = 1024
    elif n_pad % 512 == 0:
        tk = 512
    else:
        tk = 256
    tk = min(tk, n_pad)
    grid = (n_pad // tm, n_pad // tk)

    # VMEM budget: resident Y (+pipeline copy) + double-buffered A panels +
    # double-buffered output tiles + f32 accumulator + slack.
    out_item = jnp.dtype(out_dtype).itemsize
    need = (2 * n_pad * f_pad * 2
            + 2 * tm * tk * 2
            + 2 * tm * f_pad * out_item
            + tm * f_pad * 4
            + (2 << 20))
    vmem_limit = int(min(100 * 2**20, max(32 * 2**20, need)))

    kernel = functools.partial(_agg_kernel, tk=tk, apply_relu=relu)
    return pl.pallas_call(
        kernel,
        out_shape=jax.ShapeDtypeStruct((n_pad, f_pad), out_dtype),
        grid_spec=pltpu.PrefetchScalarGridSpec(
            num_scalar_prefetch=0,
            grid=grid,
            in_specs=[
                pl.BlockSpec((tm, tk), lambda i, k: (i, k)),         # A panel (streams)
                pl.BlockSpec((n_pad, f_pad), lambda i, k: (0, 0)),   # Y resident
                pl.BlockSpec((1, f_pad), lambda i, k: (0, 0)),       # bias row
            ],
            out_specs=pl.BlockSpec((tm, f_pad), lambda i, k: (i, 0)),
            scratch_shapes=[pltpu.VMEM((tm, f_pad), jnp.float32)],
        ),
        compiler_params=pltpu.CompilerParams(
            dimension_semantics=("parallel", "arbitrary"),
            vmem_limit_bytes=vmem_limit,
        ),
    )(a_p, y_p, bias_p)


# ---------------------------------------------------------------------------
# Forward pass
# ---------------------------------------------------------------------------
def gcn_forward(a_p, x, w1, b1, w2, b2, *, num_nodes, fuse=None, f_pad=_F_PAD):
    """Fused/tiled 2-layer GCN forward.

    a_p: (n_pad, n_pad) bf16 normalized adjacency, zero-padded.
    Returns shape (num_nodes,) float32.
    """
    n_pad = a_p.shape[0]
    hidden = w1.shape[1]
    assert hidden <= f_pad and f_pad % 128 == 0 and n_pad % 256 == 0
    if fuse is None:
        fuse = n_pad <= 2048  # A_hat bf16 <= 8 MiB -> resident even on v7x

    # Feature transform X @ W1 (K = num_features, tiny) hoisted into XLA.
    xw1 = jnp.dot(x, w1, preferred_element_type=jnp.float32)       # (n, hidden)
    xw1_p = _pad2(xw1, n_pad, f_pad).astype(jnp.bfloat16)
    b1_p = _pad2(jnp.asarray(b1, jnp.float32).reshape(1, -1), 1, f_pad)

    if fuse:
        ah = _fused_two_layer(a_p, xw1_p, b1_p)                    # (n_pad, f_pad) f32
    else:
        # Layer 1: bf16 output straight from the f32 accumulator.
        h = _tiled_aggregate(a_p, xw1_p, b1_p, relu=True, out_dtype=jnp.bfloat16)
        # Layer 2: A_hat @ H (use (A@H) @ W2 == A @ (H@W2); matvec done in XLA).
        zero_b = jnp.zeros((1, f_pad), jnp.float32)
        ah = _tiled_aggregate(a_p, h, zero_b, relu=False, out_dtype=jnp.float32)

    out = (jnp.dot(ah[:num_nodes, :hidden], w2,
                   preferred_element_type=jnp.float32)
           + jnp.asarray(b2, jnp.float32).reshape(1, -1))
    return out.reshape(-1)


def build_normalized_adjacency(edge_index, num_nodes, n_pad, dtype=jnp.bfloat16):
    """Dense A_hat = D^{-1/2}(A + I)D^{-1/2}, built padded + cast at source.

    Follows PyG message flow (src -> dst aggregated at dst): A[dst, src] += w,
    duplicate edges accumulate, self-loops added only where missing.  Padded
    rows/cols are exactly zero (degree 0 -> 0 normalization).
    """
    src, dst = edge_index[0], edge_index[1]
    a = jnp.zeros((n_pad, n_pad), dtype=jnp.float32)
    a = a.at[dst, src].add(1.0)
    has_self = jnp.diag(a)[:num_nodes] > 0
    self_vals = jnp.pad(jnp.where(has_self, 0.0, 1.0), (0, n_pad - num_nodes))
    a = a + jnp.diag(self_vals)
    deg = a.sum(axis=1)
    d_inv_sqrt = jnp.where(deg > 0, 1.0 / jnp.sqrt(deg), 0.0)
    return (d_inv_sqrt[:, None] * a * d_inv_sqrt[None, :]).astype(dtype)


if __name__ == "__main__":
    N = 500        # number of graph nodes (pads to 512)
    F_IN = 4       # data.num_features
    HIDDEN = 16    # conv1 output channels
    OUT = 1        # conv2 output channels

    key = jax.random.PRNGKey(0)
    k_x, k_w1, k_b1, k_w2, k_b2 = jax.random.split(key, 5)

    # Node features [N, F_IN]
    x = jax.random.normal(k_x, (N, F_IN), dtype=jnp.float32)

    # Small undirected ring graph: edges in both directions, [2, 2N]
    src = jnp.arange(N, dtype=jnp.int32)
    dst = (src + 1) % N
    edge_index = jnp.stack(
        [jnp.concatenate([src, dst]), jnp.concatenate([dst, src])], axis=0)

    n_pad = int(pl.cdiv(N, 256)) * 256
    a_p = build_normalized_adjacency(edge_index, N, n_pad)   # padded bf16

    # Deterministic parameter init (Glorot-ish scaling; synthetic weights)
    w1 = jax.random.normal(k_w1, (F_IN, HIDDEN), dtype=jnp.float32) * (
        1.0 / jnp.sqrt(F_IN))
    b1 = jax.random.normal(k_b1, (1, HIDDEN), dtype=jnp.float32) * 0.01
    w2 = jax.random.normal(k_w2, (HIDDEN, OUT), dtype=jnp.float32) * (
        1.0 / jnp.sqrt(HIDDEN))
    b2 = jax.random.normal(k_b2, (1, OUT), dtype=jnp.float32) * 0.01

    # Run both code paths (the small graph takes the fused A-resident path by
    # default; force the tiled Y-resident path as well to validate it).
    out_fused = gcn_forward(a_p, x, w1, b1, w2, b2, num_nodes=N, fuse=True)
    out_tiled = gcn_forward(a_p, x, w1, b1, w2, b2, num_nodes=N, fuse=False)
    jax.block_until_ready((out_fused, out_tiled))
    assert out_fused.shape == (N,) and out_tiled.shape == (N,)

    # Reference 1: same bf16 operand casts, f32 accumulation (validates the
    # kernels' tiling/accumulation exactly).
    a_b = a_p[:N, :N]                                   # bf16 A_hat
    xw1_b = jnp.dot(x, w1).astype(jnp.bfloat16)
    h_ref = jnp.maximum(
        jnp.dot(a_b, xw1_b, preferred_element_type=jnp.float32) + b1, 0.0)
    ah_ref = jnp.dot(a_b, h_ref.astype(jnp.bfloat16),
                     preferred_element_type=jnp.float32)
    ref_bf16 = (ah_ref @ w2 + b2).reshape(-1)
    assert jnp.allclose(out_fused, ref_bf16, atol=2e-4, rtol=2e-4), (
        float(jnp.max(jnp.abs(out_fused - ref_bf16))))
    assert jnp.allclose(out_tiled, ref_bf16, atol=2e-4, rtol=2e-4), (
        float(jnp.max(jnp.abs(out_tiled - ref_bf16))))

    # Reference 2: full-f32 module semantics (checks the bf16 approximation).
    a_f32 = build_normalized_adjacency(edge_index, N, n_pad,
                                       dtype=jnp.float32)[:N, :N]
    ref_f32 = (a_f32 @ jnp.maximum(a_f32 @ (x @ w1) + b1, 0.0) @ w2
               + b2).reshape(-1)
    assert jnp.allclose(out_fused, ref_f32, atol=5e-2, rtol=5e-2), (
        float(jnp.max(jnp.abs(out_fused - ref_f32))))
    assert jnp.allclose(out_tiled, ref_f32, atol=5e-2, rtol=5e-2), (
        float(jnp.max(jnp.abs(out_tiled - ref_f32))))

    print("KERNEL_OK")
</pallas_src>

<mosaic_0001>
module attributes {stable_mosaic.version = 11 : i64} {
  func.func @_fused_kernel(%arg0: memref<512x512xbf16, #tpu.memory_space<vmem>>, %arg1: memref<512x128xbf16, #tpu.memory_space<vmem>>, %arg2: memref<1x128xf32, #tpu.memory_space<vmem>>, %arg3: memref<512x128xf32, #tpu.memory_space<vmem>>) attributes {dimension_semantics = [], scalar_prefetch = 0 : i64, scratch_operands = 0 : i64, tpu.core_type = #tpu.core_type<tc>} {
    %c0 = arith.constant 0 : index
    %c0_0 = arith.constant 0 : index
    %0 = vector.load %arg0[%c0, %c0_0] : memref<512x512xbf16, #tpu.memory_space<vmem>>, vector<512x512xbf16>
    %c0_1 = arith.constant 0 : index
    %c0_2 = arith.constant 0 : index
    %1 = vector.load %arg1[%c0_1, %c0_2] : memref<512x128xbf16, #tpu.memory_space<vmem>>, vector<512x128xbf16>
    %cst = arith.constant dense<0.000000e+00> : vector<512x128xf32>
    %2 = tpu.matmul %0, %1, %cst {dimension_numbers = #tpu.dot_dimension_numbers<[1], [0], [0], [1], [0, 0, 1, 1], [], []>} : vector<512x512xbf16>, vector<512x128xbf16>, vector<512x128xf32> -> vector<512x128xf32>
    %c0_3 = arith.constant 0 : index
    %c0_4 = arith.constant 0 : index
    %3 = vector.load %arg2[%c0_3, %c0_4] : memref<1x128xf32, #tpu.memory_space<vmem>>, vector<1x128xf32>
    %4 = vector.broadcast %3 : vector<1x128xf32> to vector<512x128xf32>
    %5 = arith.addf %2, %4 : vector<512x128xf32>
    %cst_5 = arith.constant 0.000000e+00 : f32
    %6 = vector.broadcast %cst_5 : f32 to vector<512x128xf32>
    %7 = arith.maximumf %5, %6 : vector<512x128xf32>
    %8 = arith.truncf %7 : vector<512x128xf32> to vector<512x128xbf16>
    %cst_6 = arith.constant dense<0.000000e+00> : vector<512x128xf32>
    %9 = tpu.matmul %0, %8, %cst_6 {dimension_numbers = #tpu.dot_dimension_numbers<[1], [0], [0], [1], [0, 0, 1, 1], [], []>} : vector<512x512xbf16>, vector<512x128xbf16>, vector<512x128xf32> -> vector<512x128xf32>
    %c0_7 = arith.constant 0 : index
    %c0_8 = arith.constant 0 : index
    %10 = vector.load %arg3[%c0_7, %c0_8] : memref<512x128xf32, #tpu.memory_space<vmem>>, vector<512x128xf32>
    tpu.vector_store %arg3[%c0_7, %c0_8], %9 {strides = array<i32>} : memref<512x128xf32, #tpu.memory_space<vmem>>, vector<512x128xf32>,
    return
  }
}

</mosaic_0001>

<llo_original>
// kernel: tpu_custom_call.1
$region0: #{tpu_custom_call.1}
  #allocation0 [shape = 'u32[]', space=smem, size = 0x4, offset = 0x4, fixed_abs, tag = 'smem constant byte address 0x4 - core index']
  #allocation1 [shape = 'u32[144,128]{1,0:T(1,128)}', space=vmem, size = 0x12000, scoped, tag = 'internal scratch']
  %s0 = inlined_call_operand.hbm [shape: bf16[512,512], index: 0, kind: input, shape index: {}]
  %s1 = inlined_call_operand.hbm [shape: bf16[512,128], index: 1, kind: input, shape index: {}]
  %s2 = inlined_call_operand.vmem [shape: f32[1,128], index: 2, kind: input, shape index: {}]
  %s3 = inlined_call_operand.hbm [shape: f32[512,128], index: 3, kind: output, shape index: {}]
  %s4 = sld [smem:[#allocation0]]
  $region30: #{tpu_custom_call.1} parent=0
    _
  %s6 = ssub.s32 1, %s4
  %s7 = scalar_select 0, %s6, %s4
  $region1: #{tpu_custom_call.1} parent=0
    #allocation2 [shape = 'u8[524288]{0}', space=vmem, size = 0x80000, scoped, tag = 'input window, operand 0, single buffered']
    #allocation3 [shape = 's32[1]{0}', space=sflag, size = 0x4, scoped, tag = 'scoped memory for tpu_custom_call.1']
    #allocation4 [shape = 's32[1]{0}', space=sflag, size = 0x4, scoped, tag = 'scoped memory for tpu_custom_call.1']
    #allocation5 [shape = 'u8[131072]{0}', space=vmem, size = 0x20000, scoped, tag = 'input window, operand 1, single buffered']
    #allocation6 [shape = 's32[1]{0}', space=sflag, size = 0x4, scoped, tag = 'scoped memory for tpu_custom_call.1']
    #allocation7 [shape = 'u8[262144]{0}', space=vmem, size = 0x40000, scoped, tag = 'output window, operand 0, single buffered']
    %8 = vsyncpa [#allocation3], 0
    %9 = vsyncpa [#allocation6], 0
    %10 = vsyncpa [#allocation4], 0
    // Predicated region
    $region2: #{tpu_custom_call.1} parent=1 // pred_check
      _
    $region3: #{tpu_custom_call.1} parent=1 // pred_check_branch
      %12 = sbr.rel (0) target = $region5
    $region4: #{tpu_custom_call.1} parent=1 // pred_region
      %s14 = ssub.s32 16384, 16384
      %15 = vsyncadd [#allocation3], %s14
      %s16 = sshll.u32 [#allocation2], 4
      %s17 = int_to_ptr.vmem [resolvable:$true] %s16
      %22 = dma.hbm_to_vmem [thread:$0]  %s0, 16384, %s17, [#allocation3], 256, 256, 16
    $region5: #{tpu_custom_call.1} parent=1 // pred_fallthru
      _
    // Predicated region
    $region6: #{tpu_custom_call.1} parent=1 // pred_check
      _
    $region7: #{tpu_custom_call.1} parent=1 // pred_check_branch
      %24 = sbr.rel (0) target = $region9
    $region8: #{tpu_custom_call.1} parent=1 // pred_region
      %s26 = ssub.s32 4096, 4096
      %27 = vsyncadd [#allocation6], %s26
      %s28 = sshll.u32 [#allocation5], 4
      %s29 = int_to_ptr.vmem [resolvable:$true] %s28
      %34 = dma.hbm_to_vmem [thread:$0]  %s1, 4096, %s29, [#allocation6], 64, 64, 4
    $region9: #{tpu_custom_call.1} parent=1 // pred_fallthru
      _
    // Predicated region
    $region10: #{tpu_custom_call.1} parent=1 // pred_check
      _
    $region11: #{tpu_custom_call.1} parent=1 // pred_check_branch
      %36 = sbr.rel (0) target = $region13
    $region12: #{tpu_custom_call.1} parent=1 // pred_region
      _
    $region13: #{tpu_custom_call.1} parent=1 // pred_fallthru
      _
    // Predicated region
    $region14: #{tpu_custom_call.1} parent=1 // pred_check
      _
    $region15: #{tpu_custom_call.1} parent=1 // pred_check_branch
      %38 = sbr.rel (0) target = $region17
    $region16: #{tpu_custom_call.1} parent=1 // pred_region
      %39 = dma.done [#allocation3], 16384
    $region17: #{tpu_custom_call.1} parent=1 // pred_fallthru
      _
    // Predicated region
    $region18: #{tpu_custom_call.1} parent=1 // pred_check
      _
    $region19: #{tpu_custom_call.1} parent=1 // pred_check_branch
      %41 = sbr.rel (0) target = $region21
    $region20: #{tpu_custom_call.1} parent=1 // pred_region
      %42 = dma.done [#allocation6], 4096
    $region21: #{tpu_custom_call.1} parent=1 // pred_fallthru
      _
    %v44 = vld [vmem:[#allocation2] sm:$0xff]
    %v45 = vld [vmem:[#allocation2 + $0x8] sm:$0xff]
    %v46 = vld [vmem:[#allocation2 + $0x10] sm:$0xff]
    %v47 = vld [vmem:[#allocation2 + $0x18] sm:$0xff]
    %v48 = vld [vmem:[#allocation2 + $0x20] sm:$0xff]
    %v49 = vld [vmem:[#allocation2 + $0x28] sm:$0xff]
    %v50 = vld [vmem:[#allocation2 + $0x30] sm:$0xff]
    %v51 = vld [vmem:[#allocation2 + $0x38] sm:$0xff]
    %v52 = vld [vmem:[#allocation2 + $0x40] sm:$0xff]
    %v53 = vld [vmem:[#allocation2 + $0x48] sm:$0xff]
    %v54 = vld [vmem:[#allocation2 + $0x50] sm:$0xff]
    %v55 = vld [vmem:[#allocation2 + $0x58] sm:$0xff]
    %v56 = vld [vmem:[#allocation2 + $0x60] sm:$0xff]
    %v57 = vld [vmem:[#allocation2 + $0x68] sm:$0xff]
    %v58 = vld [vmem:[#allocation2 + $0x70] sm:$0xff]
    %v59 = vld [vmem:[#allocation2 + $0x78] sm:$0xff]
    %v60 = vld [vmem:[#allocation2 + $0x80] sm:$0xff]
    %v61 = vld [vmem:[#allocation2 + $0x88] sm:$0xff]
    %v62 = vld [vmem:[#allocation2 + $0x90] sm:$0xff]
    %v63 = vld [vmem:[#allocation2 + $0x98] sm:$0xff]
    %v64 = vld [vmem:[#allocation2 + $0xa0] sm:$0xff]
    %v65 = vld [vmem:[#allocation2 + $0xa8] sm:$0xff]
    %v66 = vld [vmem:[#allocation2 + $0xb0] sm:$0xff]
    %v67 = vld [vmem:[#allocation2 + $0xb8] sm:$0xff]
    %v68 = vld [vmem:[#allocation2 + $0xc0] sm:$0xff]
    %v69 = vld [vmem:[#allocation2 + $0xc8] sm:$0xff]
    %v70 = vld [vmem:[#allocation2 + $0xd0] sm:$0xff]
    %v71 = vld [vmem:[#allocation2 + $0xd8] sm:$0xff]
    %v72 = vld [vmem:[#allocation2 + $0xe0] sm:$0xff]
    %v73 = vld [vmem:[#allocation2 + $0xe8] sm:$0xff]
    %v74 = vld [vmem:[#allocation2 + $0xf0] sm:$0xff]
    %v75 = vld [vmem:[#allocation2 + $0xf8] sm:$0xff]
    %v76 = vld [vmem:[#allocation2 + $0x100] sm:$0xff]
    %v77 = vld [vmem:[#allocation2 + $0x108] sm:$0xff]
    %v78 = vld [vmem:[#allocation2 + $0x110] sm:$0xff]
    %v79 = vld [vmem:[#allocation2 + $0x118] sm:$0xff]
    %v80 = vld [vmem:[#allocation2 + $0x120] sm:$0xff]
    %v81 = vld [vmem:[#allocation2 + $0x128] sm:$0xff]
    %v82 = vld [vmem:[#allocation2 + $0x130] sm:$0xff]
    %v83 = vld [vmem:[#allocation2 + $0x138] sm:$0xff]
    %v84 = vld [vmem:[#allocation2 + $0x140] sm:$0xff]
    %v85 = vld [vmem:[#allocation2 + $0x148] sm:$0xff]
    %v86 = vld [vmem:[#allocation2 + $0x150] sm:$0xff]
    %v87 = vld [vmem:[#allocation2 + $0x158] sm:$0xff]
    %v88 = vld [vmem:[#allocation2 + $0x160] sm:$0xff]
    %v89 = vld [vmem:[#allocation2 + $0x168] sm:$0xff]
    %v90 = vld [vmem:[#allocation2 + $0x170] sm:$0xff]
    %v91 = vld [vmem:[#allocation2 + $0x178] sm:$0xff]
    %v92 = vld [vmem:[#allocation2 + $0x180] sm:$0xff]
    %v93 = vld [vmem:[#allocation2 + $0x188] sm:$0xff]
    %v94 = vld [vmem:[#allocation2 + $0x190] sm:$0xff]
    %v95 = vld [vmem:[#allocation2 + $0x198] sm:$0xff]
    %v96 = vld [vmem:[#allocation2 + $0x1a0] sm:$0xff]
    %v97 = vld [vmem:[#allocation2 + $0x1a8] sm:$0xff]
    %v98 = vld [vmem:[#allocation2 + $0x1b0] sm:$0xff]
    %v99 = vld [vmem:[#allocation2 + $0x1b8] sm:$0xff]
    %v100 = vld [vmem:[#allocation2 + $0x1c0] sm:$0xff]
    %v101 = vld [vmem:[#allocation2 + $0x1c8] sm:$0xff]
    %v102 = vld [vmem:[#allocation2 + $0x1d0] sm:$0xff]
    %v103 = vld [vmem:[#allocation2 + $0x1d8] sm:$0xff]
    %v104 = vld [vmem:[#allocation2 + $0x1e0] sm:$0xff]
    %v105 = vld [vmem:[#allocation2 + $0x1e8] sm:$0xff]
    %v106 = vld [vmem:[#allocation2 + $0x1f0] sm:$0xff]
    %v107 = vld [vmem:[#allocation2 + $0x1f8] sm:$0xff]
    %v108 = vld [vmem:[#allocation2 + $0x200] sm:$0xff]
    %v109 = vld [vmem:[#allocation2 + $0x208] sm:$0xff]
    %v110 = vld [vmem:[#allocation2 + $0x210] sm:$0xff]
    %v111 = vld [vmem:[#allocation2 + $0x218] sm:$0xff]
    %v112 = vld [vmem:[#allocation2 + $0x220] sm:$0xff]
    %v113 = vld [vmem:[#allocation2 + $0x228] sm:$0xff]
    %v114 = vld [vmem:[#allocation2 + $0x230] sm:$0xff]
    %v115 = vld [vmem:[#allocation2 + $0x238] sm:$0xff]
    %v116 = vld [vmem:[#allocation2 + $0x240] sm:$0xff]
    %v117 = vld [vmem:[#allocation2 + $0x248] sm:$0xff]
    %v118 = vld [vmem:[#allocation2 + $0x250] sm:$0xff]
    %v119 = vld [vmem:[#allocation2 + $0x258] sm:$0xff]
    %v120 = vld [vmem:[#allocation2 + $0x260] sm:$0xff]
    %v121 = vld [vmem:[#allocation2 + $0x268] sm:$0xff]
    %v122 = vld [vmem:[#allocation2 + $0x270] sm:$0xff]
    %v123 = vld [vmem:[#allocation2 + $0x278] sm:$0xff]
    %v124 = vld [vmem:[#allocation2 + $0x280] sm:$0xff]
    %v125 = vld [vmem:[#allocation2 + $0x288] sm:$0xff]
    %v126 = vld [vmem:[#allocation2 + $0x290] sm:$0xff]
    %v127 = vld [vmem:[#allocation2 + $0x298] sm:$0xff]
    %v128 = vld [vmem:[#allocation2 + $0x2a0] sm:$0xff]
    %v129 = vld [vmem:[#allocation2 + $0x2a8] sm:$0xff]
    %v130 = vld [vmem:[#allocation2 + $0x2b0] sm:$0xff]
    %v131 = vld [vmem:[#allocation2 + $0x2b8] sm:$0xff]
    %v132 = vld [vmem:[#allocation2 + $0x2c0] sm:$0xff]
    %v133 = vld [vmem:[#allocation2 + $0x2c8] sm:$0xff]
    %v134 = vld [vmem:[#allocation2 + $0x2d0] sm:$0xff]
    %v135 = vld [vmem:[#allocation2 + $0x2d8] sm:$0xff]
    %v136 = vld [vmem:[#allocation2 + $0x2e0] sm:$0xff]
    %v137 = vld [vmem:[#allocation2 + $0x2e8] sm:$0xff]
    %v138 = vld [vmem:[#allocation2 + $0x2f0] sm:$0xff]
    %v139 = vld [vmem:[#allocation2 + $0x2f8] sm:$0xff]
    %v140 = vld [vmem:[#allocation2 + $0x300] sm:$0xff]
    %v141 = vld [vmem:[#allocation2 + $0x308] sm:$0xff]
    %v142 = vld [vmem:[#allocation2 + $0x310] sm:$0xff]
    %v143 = vld [vmem:[#allocation2 + $0x318] sm:$0xff]
    %v144 = vld [vmem:[#allocation2 + $0x320] sm:$0xff]
    %v145 = vld [vmem:[#allocation2 + $0x328] sm:$0xff]
    %v146 = vld [vmem:[#allocation2 + $0x330] sm:$0xff]
    %v147 = vld [vmem:[#allocation2 + $0x338] sm:$0xff]
    %v148 = vld [vmem:[#allocation2 + $0x340] sm:$0xff]
    %v149 = vld [vmem:[#allocation2 + $0x348] sm:$0xff]
    %v150 = vld [vmem:[#allocation2 + $0x350] sm:$0xff]
    %v151 = vld [vmem:[#allocation2 + $0x358] sm:$0xff]
    %v152 = vld [vmem:[#allocation2 + $0x360] sm:$0xff]
    %v153 = vld [vmem:[#allocation2 + $0x368] sm:$0xff]
    %v154 = vld [vmem:[#allocation2 + $0x370] sm:$0xff]
    %v155 = vld [vmem:[#allocation2 + $0x378] sm:$0xff]
    %v156 = vld [vmem:[#allocation2 + $0x380] sm:$0xff]
    %v157 = vld [vmem:[#allocation2 + $0x388] sm:$0xff]
    %v158 = vld [vmem:[#allocation2 + $0x390] sm:$0xff]
    %v159 = vld [vmem:[#allocation2 + $0x398] sm:$0xff]
    %v160 = vld [vmem:[#allocation2 + $0x3a0] sm:$0xff]
    %v161 = vld [vmem:[#allocation2 + $0x3a8] sm:$0xff]
    %v162 = vld [vmem:[#allocation2 + $0x3b0] sm:$0xff]
    %v163 = vld [vmem:[#allocation2 + $0x3b8] sm:$0xff]
    %v164 = vld [vmem:[#allocation2 + $0x3c0] sm:$0xff]
    %v165 = vld [vmem:[#allocation2 + $0x3c8] sm:$0xff]
    %v166 = vld [vmem:[#allocation2 + $0x3d0] sm:$0xff]
    %v167 = vld [vmem:[#allocation2 + $0x3d8] sm:$0xff]
    %v168 = vld [vmem:[#allocation2 + $0x3e0] sm:$0xff]
    %v169 = vld [vmem:[#allocation2 + $0x3e8] sm:$0xff]
    %v170 = vld [vmem:[#allocation2 + $0x3f0] sm:$0xff]
    %v171 = vld [vmem:[#allocation2 + $0x3f8] sm:$0xff]
    %v172 = vld [vmem:[#allocation5] sm:$0xf]
    %v173 = vld [vmem:[#allocation5 + $0x4] sm:$0xf]
    %v174 = vld [vmem:[#allocation5 + $0x8] sm:$0xf]
    %v175 = vld [vmem:[#allocation5 + $0xc] sm:$0xf]
    %v176 = vld [vmem:[#allocation5 + $0x10] sm:$0xf]
    %v177 = vld [vmem:[#allocation5 + $0x14] sm:$0xf]
    %v178 = vld [vmem:[#allocation5 + $0x18] sm:$0xf]
    %v179 = vld [vmem:[#allocation5 + $0x1c] sm:$0xf]
    %v180 = vld [vmem:[#allocation5 + $0x20] sm:$0xf]
    %v181 = vld [vmem:[#allocation5 + $0x24] sm:$0xf]
    %v182 = vld [vmem:[#allocation5 + $0x28] sm:$0xf]
    %v183 = vld [vmem:[#allocation5 + $0x2c] sm:$0xf]
    %v184 = vld [vmem:[#allocation5 + $0x30] sm:$0xf]
    %v185 = vld [vmem:[#allocation5 + $0x34] sm:$0xf]
    %v186 = vld [vmem:[#allocation5 + $0x38] sm:$0xf]
    %v187 = vld [vmem:[#allocation5 + $0x3c] sm:$0xf]
    %v188 = vld [vmem:[#allocation5 + $0x40] sm:$0xf]
    %v189 = vld [vmem:[#allocation5 + $0x44] sm:$0xf]
    %v190 = vld [vmem:[#allocation5 + $0x48] sm:$0xf]
    %v191 = vld [vmem:[#allocation5 + $0x4c] sm:$0xf]
    %v192 = vld [vmem:[#allocation5 + $0x50] sm:$0xf]
    %v193 = vld [vmem:[#allocation5 + $0x54] sm:$0xf]
    %v194 = vld [vmem:[#allocation5 + $0x58] sm:$0xf]
    %v195 = vld [vmem:[#allocation5 + $0x5c] sm:$0xf]
    %v196 = vld [vmem:[#allocation5 + $0x60] sm:$0xf]
    %v197 = vld [vmem:[#allocation5 + $0x64] sm:$0xf]
    %v198 = vld [vmem:[#allocation5 + $0x68] sm:$0xf]
    %v199 = vld [vmem:[#allocation5 + $0x6c] sm:$0xf]
    %v200 = vld [vmem:[#allocation5 + $0x70] sm:$0xf]
    %v201 = vld [vmem:[#allocation5 + $0x74] sm:$0xf]
    %v202 = vld [vmem:[#allocation5 + $0x78] sm:$0xf]
    %v203 = vld [vmem:[#allocation5 + $0x7c] sm:$0xf]
    %v204 = vld [vmem:[#allocation5 + $0x80] sm:$0xf]
    %v205 = vld [vmem:[#allocation5 + $0x84] sm:$0xf]
    %v206 = vld [vmem:[#allocation5 + $0x88] sm:$0xf]
    %v207 = vld [vmem:[#allocation5 + $0x8c] sm:$0xf]
    %v208 = vld [vmem:[#allocation5 + $0x90] sm:$0xf]
    %v209 = vld [vmem:[#allocation5 + $0x94] sm:$0xf]
    %v210 = vld [vmem:[#allocation5 + $0x98] sm:$0xf]
    %v211 = vld [vmem:[#allocation5 + $0x9c] sm:$0xf]
    %v212 = vld [vmem:[#allocation5 + $0xa0] sm:$0xf]
    %v213 = vld [vmem:[#allocation5 + $0xa4] sm:$0xf]
    %v214 = vld [vmem:[#allocation5 + $0xa8] sm:$0xf]
    %v215 = vld [vmem:[#allocation5 + $0xac] sm:$0xf]
    %v216 = vld [vmem:[#allocation5 + $0xb0] sm:$0xf]
    %v217 = vld [vmem:[#allocation5 + $0xb4] sm:$0xf]
    %v218 = vld [vmem:[#allocation5 + $0xb8] sm:$0xf]
    %v219 = vld [vmem:[#allocation5 + $0xbc] sm:$0xf]
    %v220 = vld [vmem:[#allocation5 + $0xc0] sm:$0xf]
    %v221 = vld [vmem:[#allocation5 + $0xc4] sm:$0xf]
    %v222 = vld [vmem:[#allocation5 + $0xc8] sm:$0xf]
    %v223 = vld [vmem:[#allocation5 + $0xcc] sm:$0xf]
    %v224 = vld [vmem:[#allocation5 + $0xd0] sm:$0xf]
    %v225 = vld [vmem:[#allocation5 + $0xd4] sm:$0xf]
    %v226 = vld [vmem:[#allocation5 + $0xd8] sm:$0xf]
    %v227 = vld [vmem:[#allocation5 + $0xdc] sm:$0xf]
    %v228 = vld [vmem:[#allocation5 + $0xe0] sm:$0xf]
    %v229 = vld [vmem:[#allocation5 + $0xe4] sm:$0xf]
    %v230 = vld [vmem:[#allocation5 + $0xe8] sm:$0xf]
    %v231 = vld [vmem:[#allocation5 + $0xec] sm:$0xf]
    %v232 = vld [vmem:[#allocation5 + $0xf0] sm:$0xf]
    %v233 = vld [vmem:[#allocation5 + $0xf4] sm:$0xf]
    %v234 = vld [vmem:[#allocation5 + $0xf8] sm:$0xf]
    %v235 = vld [vmem:[#allocation5 + $0xfc] sm:$0xf]
    %v236 = vld [vmem:[%s2] sm:$0x1]
    %v238 = vlaneseq
    %v239 = vshrl.u32 %v238, 7
    %v240 = vsub.s32 0, %v239
    %v241 = vrot.slane %v236, %v240
    %v371 = vunpack.c.l.b16 %v44
    %v372 = vunpack.c.h.b16 %v44
    %v373 = vunpack.c.l.b16 %v45
    %v374 = vunpack.c.h.b16 %v45
    %v375 = vunpack.c.l.b16 %v46
    %v376 = vunpack.c.h.b16 %v46
    %v377 = vunpack.c.l.b16 %v47
    %v378 = vunpack.c.h.b16 %v47
    %v379 = vunpack.c.l.b16 %v48
    %v380 = vunpack.c.h.b16 %v48
    %v381 = vunpack.c.l.b16 %v49
    %v382 = vunpack.c.h.b16 %v49
    %v383 = vunpack.c.l.b16 %v50
    %v384 = vunpack.c.h.b16 %v50
    %v385 = vunpack.c.l.b16 %v51
    %v386 = vunpack.c.h.b16 %v51
    %v387 = vunpack.c.l.b16 %v52
    %v388 = vunpack.c.h.b16 %v52
    %v389 = vunpack.c.l.b16 %v53
    %v390 = vunpack.c.h.b16 %v53
    %v391 = vunpack.c.l.b16 %v54
    %v392 = vunpack.c.h.b16 %v54
    %v393 = vunpack.c.l.b16 %v55
    %v394 = vunpack.c.h.b16 %v55
    %v395 = vunpack.c.l.b16 %v56
    %v396 = vunpack.c.h.b16 %v56
    %v397 = vunpack.c.l.b16 %v57
    %v398 = vunpack.c.h.b16 %v57
    %v399 = vunpack.c.l.b16 %v58
    %v400 = vunpack.c.h.b16 %v58
    %v401 = vunpack.c.l.b16 %v59
    %v402 = vunpack.c.h.b16 %v59
    %v403 = vunpack.c.l.b16 %v60
    %v404 = vunpack.c.h.b16 %v60
    %v405 = vunpack.c.l.b16 %v61
    %v406 = vunpack.c.h.b16 %v61
    %v407 = vunpack.c.l.b16 %v62
    %v408 = vunpack.c.h.b16 %v62
    %v409 = vunpack.c.l.b16 %v63
    %v410 = vunpack.c.h.b16 %v63
    %v411 = vunpack.c.l.b16 %v64
    %v412 = vunpack.c.h.b16 %v64
    %v413 = vunpack.c.l.b16 %v65
    %v414 = vunpack.c.h.b16 %v65
    %v415 = vunpack.c.l.b16 %v66
    %v416 = vunpack.c.h.b16 %v66
    %v417 = vunpack.c.l.b16 %v67
    %v418 = vunpack.c.h.b16 %v67
    %v419 = vunpack.c.l.b16 %v68
    %v420 = vunpack.c.h.b16 %v68
    %v421 = vunpack.c.l.b16 %v69
    %v422 = vunpack.c.h.b16 %v69
    %v423 = vunpack.c.l.b16 %v70
    %v424 = vunpack.c.h.b16 %v70
    %v425 = vunpack.c.l.b16 %v71
    %v426 = vunpack.c.h.b16 %v71
    %v427 = vunpack.c.l.b16 %v72
    %v428 = vunpack.c.h.b16 %v72
    %v429 = vunpack.c.l.b16 %v73
    %v430 = vunpack.c.h.b16 %v73
    %v431 = vunpack.c.l.b16 %v74
    %v432 = vunpack.c.h.b16 %v74
    %v433 = vunpack.c.l.b16 %v75
    %v434 = vunpack.c.h.b16 %v75
    %v435 = vunpack.c.l.b16 %v76
    %v436 = vunpack.c.h.b16 %v76
    %v437 = vunpack.c.l.b16 %v77
    %v438 = vunpack.c.h.b16 %v77
    %v439 = vunpack.c.l.b16 %v78
    %v440 = vunpack.c.h.b16 %v78
    %v441 = vunpack.c.l.b16 %v79
    %v442 = vunpack.c.h.b16 %v79
    %v443 = vunpack.c.l.b16 %v80
    %v444 = vunpack.c.h.b16 %v80
    %v445 = vunpack.c.l.b16 %v81
    %v446 = vunpack.c.h.b16 %v81
    %v447 = vunpack.c.l.b16 %v82
    %v448 = vunpack.c.h.b16 %v82
    %v449 = vunpack.c.l.b16 %v83
    %v450 = vunpack.c.h.b16 %v83
    %v451 = vunpack.c.l.b16 %v84
    %v452 = vunpack.c.h.b16 %v84
    %v453 = vunpack.c.l.b16 %v85
    %v454 = vunpack.c.h.b16 %v85
    %v455 = vunpack.c.l.b16 %v86
    %v456 = vunpack.c.h.b16 %v86
    %v457 = vunpack.c.l.b16 %v87
    %v458 = vunpack.c.h.b16 %v87
    %v459 = vunpack.c.l.b16 %v88
    %v460 = vunpack.c.h.b16 %v88
    %v461 = vunpack.c.l.b16 %v89
    %v462 = vunpack.c.h.b16 %v89
    %v463 = vunpack.c.l.b16 %v90
    %v464 = vunpack.c.h.b16 %v90
    %v465 = vunpack.c.l.b16 %v91
    %v466 = vunpack.c.h.b16 %v91
    %v467 = vunpack.c.l.b16 %v92
    %v468 = vunpack.c.h.b16 %v92
    %v469 = vunpack.c.l.b16 %v93
    %v470 = vunpack.c.h.b16 %v93
    %v471 = vunpack.c.l.b16 %v94
    %v472 = vunpack.c.h.b16 %v94
    %v473 = vunpack.c.l.b16 %v95
    %v474 = vunpack.c.h.b16 %v95
    %v475 = vunpack.c.l.b16 %v96
    %v476 = vunpack.c.h.b16 %v96
    %v477 = vunpack.c.l.b16 %v97
    %v478 = vunpack.c.h.b16 %v97
    %v479 = vunpack.c.l.b16 %v98
    %v480 = vunpack.c.h.b16 %v98
    %v481 = vunpack.c.l.b16 %v99
    %v482 = vunpack.c.h.b16 %v99
    %v483 = vunpack.c.l.b16 %v100
    %v484 = vunpack.c.h.b16 %v100
    %v485 = vunpack.c.l.b16 %v101
    %v486 = vunpack.c.h.b16 %v101
    %v487 = vunpack.c.l.b16 %v102
    %v488 = vunpack.c.h.b16 %v102
    %v489 = vunpack.c.l.b16 %v103
    %v490 = vunpack.c.h.b16 %v103
    %v491 = vunpack.c.l.b16 %v104
    %v492 = vunpack.c.h.b16 %v104
    %v493 = vunpack.c.l.b16 %v105
    %v494 = vunpack.c.h.b16 %v105
    %v495 = vunpack.c.l.b16 %v106
    %v496 = vunpack.c.h.b16 %v106
    %v497 = vunpack.c.l.b16 %v107
    %v498 = vunpack.c.h.b16 %v107
    %v499 = vunpack.c.l.b16 %v108
    %v500 = vunpack.c.h.b16 %v108
    %v501 = vunpack.c.l.b16 %v109
    %v502 = vunpack.c.h.b16 %v109
    %v503 = vunpack.c.l.b16 %v110
    %v504 = vunpack.c.h.b16 %v110
    %v505 = vunpack.c.l.b16 %v111
    %v506 = vunpack.c.h.b16 %v111
    %v507 = vunpack.c.l.b16 %v112
    %v508 = vunpack.c.h.b16 %v112
    %v509 = vunpack.c.l.b16 %v113
    %v510 = vunpack.c.h.b16 %v113
    %v511 = vunpack.c.l.b16 %v114
    %v512 = vunpack.c.h.b16 %v114
    %v513 = vunpack.c.l.b16 %v115
    %v514 = vunpack.c.h.b16 %v115
    %v515 = vunpack.c.l.b16 %v116
    %v516 = vunpack.c.h.b16 %v116
    %v517 = vunpack.c.l.b16 %v117
    %v518 = vunpack.c.h.b16 %v117
    %v519 = vunpack.c.l.b16 %v118
    %v520 = vunpack.c.h.b16 %v118
    %v521 = vunpack.c.l.b16 %v119
    %v522 = vunpack.c.h.b16 %v119
    %v523 = vunpack.c.l.b16 %v120
    %v524 = vunpack.c.h.b16 %v120
    %v525 = vunpack.c.l.b16 %v121
    %v526 = vunpack.c.h.b16 %v121
    %v527 = vunpack.c.l.b16 %v122
    %v528 = vunpack.c.h.b16 %v122
    %v529 = vunpack.c.l.b16 %v123
    %v530 = vunpack.c.h.b16 %v123
    %v531 = vunpack.c.l.b16 %v124
    %v532 = vunpack.c.h.b16 %v124
    %v533 = vunpack.c.l.b16 %v125
    %v534 = vunpack.c.h.b16 %v125
    %v535 = vunpack.c.l.b16 %v126
    %v536 = vunpack.c.h.b16 %v126
    %v537 = vunpack.c.l.b16 %v127
    %v538 = vunpack.c.h.b16 %v127
    %v539 = vunpack.c.l.b16 %v128
    %v540 = vunpack.c.h.b16 %v128
    %v541 = vunpack.c.l.b16 %v129
    %v542 = vunpack.c.h.b16 %v129
    %v543 = vunpack.c.l.b16 %v130
    %v544 = vunpack.c.h.b16 %v130
    %v545 = vunpack.c.l.b16 %v131
    %v546 = vunpack.c.h.b16 %v131
    %v547 = vunpack.c.l.b16 %v132
    %v548 = vunpack.c.h.b16 %v132
    %v549 = vunpack.c.l.b16 %v133
    %v550 = vunpack.c.h.b16 %v133
    %v551 = vunpack.c.l.b16 %v134
    %v552 = vunpack.c.h.b16 %v134
    %v553 = vunpack.c.l.b16 %v135
    %v554 = vunpack.c.h.b16 %v135
    %v555 = vunpack.c.l.b16 %v136
    %v556 = vunpack.c.h.b16 %v136
    %v557 = vunpack.c.l.b16 %v137
    %v558 = vunpack.c.h.b16 %v137
    %v559 = vunpack.c.l.b16 %v138
    %v560 = vunpack.c.h.b16 %v138
    %v561 = vunpack.c.l.b16 %v139
    %v562 = vunpack.c.h.b16 %v139
    %v563 = vunpack.c.l.b16 %v140
    %v564 = vunpack.c.h.b16 %v140
    %v565 = vunpack.c.l.b16 %v141
    %v566 = vunpack.c.h.b16 %v141
    %v567 = vunpack.c.l.b16 %v142
    %v568 = vunpack.c.h.b16 %v142
    %v569 = vunpack.c.l.b16 %v143
    %v570 = vunpack.c.h.b16 %v143
    %v571 = vunpack.c.l.b16 %v144
    %v572 = vunpack.c.h.b16 %v144
    %v573 = vunpack.c.l.b16 %v145
    %v574 = vunpack.c.h.b16 %v145
    %v575 = vunpack.c.l.b16 %v146
    %v576 = vunpack.c.h.b16 %v146
    %v577 = vunpack.c.l.b16 %v147
    %v578 = vunpack.c.h.b16 %v147
    %v579 = vunpack.c.l.b16 %v148
    %v580 = vunpack.c.h.b16 %v148
    %v581 = vunpack.c.l.b16 %v149
    %v582 = vunpack.c.h.b16 %v149
    %v583 = vunpack.c.l.b16 %v150
    %v584 = vunpack.c.h.b16 %v150
    %v585 = vunpack.c.l.b16 %v151
    %v586 = vunpack.c.h.b16 %v151
    %v587 = vunpack.c.l.b16 %v152
    %v588 = vunpack.c.h.b16 %v152
    %v589 = vunpack.c.l.b16 %v153
    %v590 = vunpack.c.h.b16 %v153
    %v591 = vunpack.c.l.b16 %v154
    %v592 = vunpack.c.h.b16 %v154
    %v593 = vunpack.c.l.b16 %v155
    %v594 = vunpack.c.h.b16 %v155
    %v595 = vunpack.c.l.b16 %v156
    %v596 = vunpack.c.h.b16 %v156
    %v597 = vunpack.c.l.b16 %v157
    %v598 = vunpack.c.h.b16 %v157
    %v599 = vunpack.c.l.b16 %v158
    %v600 = vunpack.c.h.b16 %v158
    %v601 = vunpack.c.l.b16 %v159
    %v602 = vunpack.c.h.b16 %v159
    %v603 = vunpack.c.l.b16 %v160
    %v604 = vunpack.c.h.b16 %v160
    %v605 = vunpack.c.l.b16 %v161
    %v606 = vunpack.c.h.b16 %v161
    %v607 = vunpack.c.l.b16 %v162
    %v608 = vunpack.c.h.b16 %v162
    %v609 = vunpack.c.l.b16 %v163
    %v610 = vunpack.c.h.b16 %v163
    %v611 = vunpack.c.l.b16 %v164
    %v612 = vunpack.c.h.b16 %v164
    %v613 = vunpack.c.l.b16 %v165
    %v614 = vunpack.c.h.b16 %v165
    %v615 = vunpack.c.l.b16 %v166
    %v616 = vunpack.c.h.b16 %v166
    %v617 = vunpack.c.l.b16 %v167
    %v618 = vunpack.c.h.b16 %v167
    %v619 = vunpack.c.l.b16 %v168
    %v620 = vunpack.c.h.b16 %v168
    %v621 = vunpack.c.l.b16 %v169
    %v622 = vunpack.c.h.b16 %v169
    %v623 = vunpack.c.l.b16 %v170
    %v624 = vunpack.c.h.b16 %v170
    %v625 = vunpack.c.l.b16 %v171
    %v626 = vunpack.c.h.b16 %v171
    %v627 = vpack.c.b16 %v375, %v371
    %v628 = vpack.c.b16 %v376, %v372
    %v629 = vpack.c.b16 %v377, %v373
    %v630 = vpack.c.b16 %v378, %v374
    %v631 = vpack.c.b16 %v383, %v379
    %v632 = vpack.c.b16 %v384, %v380
    %v633 = vpack.c.b16 %v385, %v381
    %v634 = vpack.c.b16 %v386, %v382
    %v635 = vpack.c.b16 %v391, %v387
    %v636 = vpack.c.b16 %v392, %v388
    %v637 = vpack.c.b16 %v393, %v389
    %v638 = vpack.c.b16 %v394, %v390
    %v639 = vpack.c.b16 %v399, %v395
    %v640 = vpack.c.b16 %v400, %v396
    %v641 = vpack.c.b16 %v401, %v397
    %v642 = vpack.c.b16 %v402, %v398
    %v643 = vpack.c.b16 %v407, %v403
    %v644 = vpack.c.b16 %v408, %v404
    %v645 = vpack.c.b16 %v409, %v405
    %v646 = vpack.c.b16 %v410, %v406
    %v647 = vpack.c.b16 %v415, %v411
    %v648 = vpack.c.b16 %v416, %v412
    %v649 = vpack.c.b16 %v417, %v413
    %v650 = vpack.c.b16 %v418, %v414
    %v651 = vpack.c.b16 %v423, %v419
    %v652 = vpack.c.b16 %v424, %v420
    %v653 = vpack.c.b16 %v425, %v421
    %v654 = vpack.c.b16 %v426, %v422
    %v655 = vpack.c.b16 %v431, %v427
    %v656 = vpack.c.b16 %v432, %v428
    %v657 = vpack.c.b16 %v433, %v429
    %v658 = vpack.c.b16 %v434, %v430
    %v659 = vpack.c.b16 %v439, %v435
    %v660 = vpack.c.b16 %v440, %v436
    %v661 = vpack.c.b16 %v441, %v437
    %v662 = vpack.c.b16 %v442, %v438
    %v663 = vpack.c.b16 %v447, %v443
    %v664 = vpack.c.b16 %v448, %v444
    %v665 = vpack.c.b16 %v449, %v445
    %v666 = vpack.c.b16 %v450, %v446
    %v667 = vpack.c.b16 %v455, %v451
    %v668 = vpack.c.b16 %v456, %v452
    %v669 = vpack.c.b16 %v457, %v453
    %v670 = vpack.c.b16 %v458, %v454
    %v671 = vpack.c.b16 %v463, %v459
    %v672 = vpack.c.b16 %v464, %v460
    %v673 = vpack.c.b16 %v465, %v461
    %v674 = vpack.c.b16 %v466, %v462
    %v675 = vpack.c.b16 %v471, %v467
    %v676 = vpack.c.b16 %v472, %v468
    %v677 = vpack.c.b16 %v473, %v469
    %v678 = vpack.c.b16 %v474, %v470
    %v679 = vpack.c.b16 %v479, %v475
    %v680 = vpack.c.b16 %v480, %v476
    %v681 = vpack.c.b16 %v481, %v477
    %v682 = vpack.c.b16 %v482, %v478
    %v683 = vpack.c.b16 %v487, %v483
    %v684 = vpack.c.b16 %v488, %v484
    %v685 = vpack.c.b16 %v489, %v485
    %v686 = vpack.c.b16 %v490, %v486
    %v687 = vpack.c.b16 %v495, %v491
    %v688 = vpack.c.b16 %v496, %v492
    %v689 = vpack.c.b16 %v497, %v493
    %v690 = vpack.c.b16 %v498, %v494
    %v691 = vpack.c.b16 %v503, %v499
    %v692 = vpack.c.b16 %v504, %v500
    %v693 = vpack.c.b16 %v505, %v501
    %v694 = vpack.c.b16 %v506, %v502
    %v695 = vpack.c.b16 %v511, %v507
    %v696 = vpack.c.b16 %v512, %v508
    %v697 = vpack.c.b16 %v513, %v509
    %v698 = vpack.c.b16 %v514, %v510
    %v699 = vpack.c.b16 %v519, %v515
    %v700 = vpack.c.b16 %v520, %v516
    %v701 = vpack.c.b16 %v521, %v517
    %v702 = vpack.c.b16 %v522, %v518
    %v703 = vpack.c.b16 %v527, %v523
    %v704 = vpack.c.b16 %v528, %v524
    %v705 = vpack.c.b16 %v529, %v525
    %v706 = vpack.c.b16 %v530, %v526
    %v707 = vpack.c.b16 %v535, %v531
    %v708 = vpack.c.b16 %v536, %v532
    %v709 = vpack.c.b16 %v537, %v533
    %v710 = vpack.c.b16 %v538, %v534
    %v711 = vpack.c.b16 %v543, %v539
    %v712 = vpack.c.b16 %v544, %v540
    %v713 = vpack.c.b16 %v545, %v541
    %v714 = vpack.c.b16 %v546, %v542
    %v715 = vpack.c.b16 %v551, %v547
    %v716 = vpack.c.b16 %v552, %v548
    %v717 = vpack.c.b16 %v553, %v549
    %v718 = vpack.c.b16 %v554, %v550
    %v719 = vpack.c.b16 %v559, %v555
    %v720 = vpack.c.b16 %v560, %v556
    %v721 = vpack.c.b16 %v561, %v557
    %v722 = vpack.c.b16 %v562, %v558
    %v723 = vpack.c.b16 %v567, %v563
    %v724 = vpack.c.b16 %v568, %v564
    %v725 = vpack.c.b16 %v569, %v565
    %v726 = vpack.c.b16 %v570, %v566
    %v727 = vpack.c.b16 %v575, %v571
    %v728 = vpack.c.b16 %v576, %v572
    %v729 = vpack.c.b16 %v577, %v573
    %v730 = vpack.c.b16 %v578, %v574
    %v731 = vpack.c.b16 %v583, %v579
    %v732 = vpack.c.b16 %v584, %v580
    %v733 = vpack.c.b16 %v585, %v581
    %v734 = vpack.c.b16 %v586, %v582
    %v735 = vpack.c.b16 %v591, %v587
    %v736 = vpack.c.b16 %v592, %v588
    %v737 = vpack.c.b16 %v593, %v589
    %v738 = vpack.c.b16 %v594, %v590
    %v739 = vpack.c.b16 %v599, %v595
    %v740 = vpack.c.b16 %v600, %v596
    %v741 = vpack.c.b16 %v601, %v597
    %v742 = vpack.c.b16 %v602, %v598
    %v743 = vpack.c.b16 %v607, %v603
    %v744 = vpack.c.b16 %v608, %v604
    %v745 = vpack.c.b16 %v609, %v605
    %v746 = vpack.c.b16 %v610, %v606
    %v747 = vpack.c.b16 %v615, %v611
    %v748 = vpack.c.b16 %v616, %v612
    %v749 = vpack.c.b16 %v617, %v613
    %v750 = vpack.c.b16 %v618, %v614
    %v751 = vpack.c.b16 %v623, %v619
    %v752 = vpack.c.b16 %v624, %v620
    %v753 = vpack.c.b16 %v625, %v621
    %v754 = vpack.c.b16 %v626, %v622
    %v947 = vunpack.c.l.b16 %v172
    %v948 = vunpack.c.l.b16 %v173
    %v949 = vunpack.c.l.b16 %v174
    %v950 = vunpack.c.l.b16 %v175
    %v951 = vunpack.c.l.b16 %v176
    %v952 = vunpack.c.l.b16 %v177
    %v953 = vunpack.c.l.b16 %v178
    %v954 = vunpack.c.l.b16 %v179
    %v955 = vunpack.c.l.b16 %v180
    %v956 = vunpack.c.l.b16 %v181
    %v957 = vunpack.c.l.b16 %v182
    %v958 = vunpack.c.l.b16 %v183
    %v959 = vunpack.c.l.b16 %v184
    %v960 = vunpack.c.l.b16 %v185
    %v961 = vunpack.c.l.b16 %v186
    %v962 = vunpack.c.l.b16 %v187
    %v963 = vunpack.c.l.b16 %v188
    %v964 = vunpack.c.l.b16 %v189
    %v965 = vunpack.c.l.b16 %v190
    %v966 = vunpack.c.l.b16 %v191
    %v967 = vunpack.c.l.b16 %v192
    %v968 = vunpack.c.l.b16 %v193
    %v969 = vunpack.c.l.b16 %v194
    %v970 = vunpack.c.l.b16 %v195
    %v971 = vunpack.c.l.b16 %v196
    %v972 = vunpack.c.l.b16 %v197
    %v973 = vunpack.c.l.b16 %v198
    %v974 = vunpack.c.l.b16 %v199
    %v975 = vunpack.c.l.b16 %v200
    %v976 = vunpack.c.l.b16 %v201
    %v977 = vunpack.c.l.b16 %v202
    %v978 = vunpack.c.l.b16 %v203
    %v979 = vunpack.c.l.b16 %v204
    %v980 = vunpack.c.l.b16 %v205
    %v981 = vunpack.c.l.b16 %v206
    %v982 = vunpack.c.l.b16 %v207
    %v983 = vunpack.c.l.b16 %v208
    %v984 = vunpack.c.l.b16 %v209
    %v985 = vunpack.c.l.b16 %v210
    %v986 = vunpack.c.l.b16 %v211
    %v987 = vunpack.c.l.b16 %v212
    %v988 = vunpack.c.l.b16 %v213
    %v989 = vunpack.c.l.b16 %v214
    %v990 = vunpack.c.l.b16 %v215
    %v991 = vunpack.c.l.b16 %v216
    %v992 = vunpack.c.l.b16 %v217
    %v993 = vunpack.c.l.b16 %v218
    %v994 = vunpack.c.l.b16 %v219
    %v995 = vunpack.c.l.b16 %v220
    %v996 = vunpack.c.l.b16 %v221
    %v997 = vunpack.c.l.b16 %v222
    %v998 = vunpack.c.l.b16 %v223
    %v999 = vunpack.c.l.b16 %v224
    %v1000 = vunpack.c.l.b16 %v225
    %v1001 = vunpack.c.l.b16 %v226
    %v1002 = vunpack.c.l.b16 %v227
    %v1003 = vunpack.c.l.b16 %v228
    %v1004 = vunpack.c.l.b16 %v229
    %v1005 = vunpack.c.l.b16 %v230
    %v1006 = vunpack.c.l.b16 %v231
    %v1007 = vunpack.c.l.b16 %v232
    %v1008 = vunpack.c.l.b16 %v233
    %v1009 = vunpack.c.l.b16 %v234
    %v1010 = vunpack.c.l.b16 %v235
    %v1011 = vpack.c.b16 %v948, %v947
    %v1012 = vpack.c.b16 %v950, %v949
    %v1013 = vpack.c.b16 %v952, %v951
    %v1014 = vpack.c.b16 %v954, %v953
    %v1015 = vpack.c.b16 %v956, %v955
    %v1016 = vpack.c.b16 %v958, %v957
    %v1017 = vpack.c.b16 %v960, %v959
    %v1018 = vpack.c.b16 %v962, %v961
    %v1019 = vpack.c.b16 %v964, %v963
    %v1020 = vpack.c.b16 %v966, %v965
    %v1021 = vpack.c.b16 %v968, %v967
    %v1022 = vpack.c.b16 %v970, %v969
    %v1023 = vpack.c.b16 %v972, %v971
    %v1024 = vpack.c.b16 %v974, %v973
    %v1025 = vpack.c.b16 %v976, %v975
    %v1026 = vpack.c.b16 %v978, %v977
    %v1027 = vpack.c.b16 %v980, %v979
    %v1028 = vpack.c.b16 %v982, %v981
    %v1029 = vpack.c.b16 %v984, %v983
    %v1030 = vpack.c.b16 %v986, %v985
    %v1031 = vpack.c.b16 %v988, %v987
    %v1032 = vpack.c.b16 %v990, %v989
    %v1033 = vpack.c.b16 %v992, %v991
    %v1034 = vpack.c.b16 %v994, %v993
    %v1035 = vpack.c.b16 %v996, %v995
    %v1036 = vpack.c.b16 %v998, %v997
    %v1037 = vpack.c.b16 %v1000, %v999
    %v1038 = vpack.c.b16 %v1002, %v1001
    %v1039 = vpack.c.b16 %v1004, %v1003
    %v1040 = vpack.c.b16 %v1006, %v1005
    %v1041 = vpack.c.b16 %v1008, %v1007
    %v1042 = vpack.c.b16 %v1010, %v1009
    %1075 = vmatprep.subr.bf16.mxu0 0
    %1076 = vmatpush1.bf16.msra.mxu0 %v1011
    %1077 = vmatprep.subr.bf16.mxu0 0
    %1078 = vmatpush1.bf16.msra.mxu0 %v1012
    %1079 = vmatprep.subr.bf16.mxu0 0
    %1080 = vmatpush1.bf16.msra.mxu0 %v1013
    %1081 = vmatprep.subr.bf16.mxu0 0
    %1082 = vmatpush1.bf16.msra.mxu0 %v1014
    %1083 = vmatprep.subr.bf16.mxu0 0
    %1084 = vmatpush1.bf16.msra.mxu0 %v1015
    %1085 = vmatprep.subr.bf16.mxu0 0
    %1086 = vmatpush1.bf16.msra.mxu0 %v1016
    %1087 = vmatprep.subr.bf16.mxu0 0
    %1088 = vmatpush1.bf16.msra.mxu0 %v1017
    %1089 = vmatprep.subr.bf16.mxu0 0
    %1090 = vmatpush1.bf16.msra.mxu0 %v1018
    %1091 = vmatprep.subr.bf16.mxu0 0
    %1092 = vmatpush1.bf16.msra.mxu0 %v1019
    %1093 = vmatprep.subr.bf16.mxu0 0
    %1094 = vmatpush1.bf16.msra.mxu0 %v1020
    %1095 = vmatprep.subr.bf16.mxu0 0
    %1096 = vmatpush1.bf16.msra.mxu0 %v1021
    %1097 = vmatprep.subr.bf16.mxu0 0
    %1098 = vmatpush1.bf16.msra.mxu0 %v1022
    %1099 = vmatprep.subr.bf16.mxu0 0
    %1100 = vmatpush1.bf16.msra.mxu0 %v1023
    %1101 = vmatprep.subr.bf16.mxu0 0
    %1102 = vmatpush1.bf16.msra.mxu0 %v1024
    %1103 = vmatprep.subr.bf16.mxu0 0
    %1104 = vmatpush1.bf16.msra.mxu0 %v1025
    %1105 = vmatprep.subr.bf16.mxu0 0
    %1106 = vmatpush1.bf16.msra.mxu0 %v1026
    %1107 = vmatprep.mubr.bf16.mxu0 %v628
    %1108 = vmatmul.mubr.bf16.gmra.mrb[0].mxu0 %v627
    %v1109 = vpop.f32.mrb[0].mxu0
    %v1110 = vadd.f32 %v241, %v1109
    %v1111 = vpop.f32.mrb[0].mxu0
    %v1112 = vpop.f32.mrb[0].mxu0
    %v1113 = vadd.f32 %v241, %v1112
    %v1114 = vpop.f32.mrb[0].mxu0
    %1115 = vmatprep.mubr.bf16.mxu0 %v632
    %1116 = vmatmul.mubr.bf16.gmra.mrb[0].mxu0 %v631
    %v1117 = vpop.f32.mrb[0].mxu0
    %v1118 = vadd.f32 %v241, %v1117
    %v1119 = vpop.f32.mrb[0].mxu0
    %v1120 = vpop.f32.mrb[0].mxu0
    %v1121 = vadd.f32 %v241, %v1120
    %v1122 = vpop.f32.mrb[0].mxu0
    %1123 = vmatprep.mubr.bf16.mxu0 %v636
    %1124 = vmatmul.mubr.bf16.gmra.mrb[0].mxu0 %v635
    %v1125 = vpop.f32.mrb[0].mxu0
    %v1126 = vadd.f32 %v241, %v1125
    %v1127 = vpop.f32.mrb[0].mxu0
    %v1128 = vpop.f32.mrb[0].mxu0
    %v1129 = vadd.f32 %v241, %v1128
    %v1130 = vpop.f32.mrb[0].mxu0
    %1131 = vmatprep.mubr.bf16.mxu0 %v640
    %1132 = vmatmul.mubr.bf16.gmra.mrb[0].mxu0 %v639
    %v1133 = vpop.f32.mrb[0].mxu0
    %v1134 = vadd.f32 %v241, %v1133
    %v1135 = vpop.f32.mrb[0].mxu0
    %v1136 = vpop.f32.mrb[0].mxu0
    %v1137 = vadd.f32 %v241, %v1136
    %v1138 = vpop.f32.mrb[0].mxu0
    %1139 = vmatprep.mubr.bf16.mxu0 %v644
    %1140 = vmatmul.mubr.bf16.gmra.mrb[0].mxu0 %v643
    %v1141 = vpop.f32.mrb[0].mxu0
    %v1142 = vadd.f32 %v241, %v1141
    %v1143 = vpop.f32.mrb[0].mxu0
    %v1144 = vpop.f32.mrb[0].mxu0
    %v1145 = vadd.f32 %v241, %v1144
    %v1146 = vpop.f32.mrb[0].mxu0
    %1147 = vmatprep.mubr.bf16.mxu0 %v648
    %1148 = vmatmul.mubr.bf16.gmra.mrb[0].mxu0 %v647
    %v1149 = vpop.f32.mrb[0].mxu0
    %v1150 = vadd.f32 %v241, %v1149
    %v1151 = vpop.f32.mrb[0].mxu0
    %v1152 = vpop.f32.mrb[0].mxu0
    %v1153 = vadd.f32 %v241, %v1152
    %v1154 = vpop.f32.mrb[0].mxu0
    %1155 = vmatprep.mubr.bf16.mxu0 %v652
    %1156 = vmatmul.mubr.bf16.gmra.mrb[0].mxu0 %v651
    %v1157 = vpop.f32.mrb[0].mxu0
    %v1158 = vadd.f32 %v241, %v1157
    %v1159 = vpop.f32.mrb[0].mxu0
    %v1160 = vpop.f32.mrb[0].mxu0
    %v1161 = vadd.f32 %v241, %v1160
    %v1162 = vpop.f32.mrb[0].mxu0
    %1163 = vmatprep.mubr.bf16.mxu0 %v656
    %1164 = vmatmul.mubr.bf16.gmra.mrb[0].mxu0 %v655
    %v1165 = vpop.f32.mrb[0].mxu0
    %v1166 = vadd.f32 %v241, %v1165
    %v1167 = vpop.f32.mrb[0].mxu0
    %v1168 = vpop.f32.mrb[0].mxu0
    %v1169 = vadd.f32 %v241, %v1168
    %v1170 = vpop.f32.mrb[0].mxu0
    %1171 = vmatprep.mubr.bf16.mxu0 %v660
    %1172 = vmatmul.mubr.bf16.gmra.mrb[0].mxu0 %v659
    %v1173 = vpop.f32.mrb[0].mxu0
    %v1174 = vadd.f32 %v241, %v1173
    %v1175 = vpop.f32.mrb[0].mxu0
    %v1176 = vpop.f32.mrb[0].mxu0
    %v1177 = vadd.f32 %v241, %v1176
    %v1178 = vpop.f32.mrb[0].mxu0
    %1179 = vmatprep.mubr.bf16.mxu0 %v664
    %1180 = vmatmul.mubr.bf16.gmra.mrb[0].mxu0 %v663
    %v1181 = vpop.f32.mrb[0].mxu0
    %v1182 = vadd.f32 %v241, %v1181
    %v1183 = vpop.f32.mrb[0].mxu0
    %v1184 = vpop.f32.mrb[0].mxu0
    %v1185 = vadd.f32 %v241, %v1184
    %v1186 = vpop.f32.mrb[0].mxu0
    %1187 = vmatprep.mubr.bf16.mxu0 %v668
    %1188 = vmatmul.mubr.bf16.gmra.mrb[0].mxu0 %v667
    %v1189 = vpop.f32.mrb[0].mxu0
    %v1190 = vadd.f32 %v241, %v1189
    %v1191 = vpop.f32.mrb[0].mxu0
    %v1192 = vpop.f32.mrb[0].mxu0
    %v1193 = vadd.f32 %v241, %v1192
    %v1194 = vpop.f32.mrb[0].mxu0
    %1195 = vmatprep.mubr.bf16.mxu0 %v672
    %1196 = vmatmul.mubr.bf16.gmra.mrb[0].mxu0 %v671
    %v1197 = vpop.f32.mrb[0].mxu0
    %v1198 = vadd.f32 %v241, %v1197
    %v1199 = vpop.f32.mrb[0].mxu0
    %v1200 = vpop.f32.mrb[0].mxu0
    %v1201 = vadd.f32 %v241, %v1200
    %v1202 = vpop.f32.mrb[0].mxu0
    %1203 = vmatprep.mubr.bf16.mxu0 %v676
    %1204 = vmatmul.mubr.bf16.gmra.mrb[0].mxu0 %v675
    %v1205 = vpop.f32.mrb[0].mxu0
    %v1206 = vadd.f32 %v241, %v1205
    %v1207 = vpop.f32.mrb[0].mxu0
    %v1208 = vpop.f32.mrb[0].mxu0
    %v1209 = vadd.f32 %v241, %v1208
    %v1210 = vpop.f32.mrb[0].mxu0
    %1211 = vmatprep.mubr.bf16.mxu0 %v680
    %1212 = vmatmul.mubr.bf16.gmra.mrb[0].mxu0 %v679
    %v1213 = vpop.f32.mrb[0].mxu0
    %v1214 = vadd.f32 %v241, %v1213
    %v1215 = vpop.f32.mrb[0].mxu0
    %v1216 = vpop.f32.mrb[0].mxu0
    %v1217 = vadd.f32 %v241, %v1216
    %v1218 = vpop.f32.mrb[0].mxu0
    %1219 = vmatprep.mubr.bf16.mxu0 %v684
    %1220 = vmatmul.mubr.bf16.gmra.mrb[0].mxu0 %v683
    %v1221 = vpop.f32.mrb[0].mxu0
    %v1222 = vadd.f32 %v241, %v1221
    %v1223 = vpop.f32.mrb[0].mxu0
    %v1224 = vpop.f32.mrb[0].mxu0
    %v1225 = vadd.f32 %v241, %v1224
    %v1226 = vpop.f32.mrb[0].mxu0
    %1227 = vmatprep.mubr.bf16.mxu0 %v688
    %1228 = vmatmul.mubr.bf16.gmra.mrb[0].mxu0 %v687
    %v1229 = vpop.f32.mrb[0].mxu0
    %v1230 = vadd.f32 %v241, %v1229
    %v1231 = vpop.f32.mrb[0].mxu0
    %v1232 = vpop.f32.mrb[0].mxu0
    %v1233 = vadd.f32 %v241, %v1232
    %v1234 = vpop.f32.mrb[0].mxu0
    %1235 = vmatprep.mubr.bf16.mxu0 %v692
    %1236 = vmatmul.mubr.bf16.gmra.mrb[0].mxu0 %v691
    %v1237 = vpop.f32.mrb[0].mxu0
    %v1238 = vadd.f32 %v241, %v1237
    %v1239 = vpop.f32.mrb[0].mxu0
    %v1240 = vpop.f32.mrb[0].mxu0
    %v1241 = vadd.f32 %v241, %v1240
    %v1242 = vpop.f32.mrb[0].mxu0
    %1243 = vmatprep.mubr.bf16.mxu0 %v696
    %1244 = vmatmul.mubr.bf16.gmra.mrb[0].mxu0 %v695
    %v1245 = vpop.f32.mrb[0].mxu0
    %v1246 = vadd.f32 %v241, %v1245
    %v1247 = vpop.f32.mrb[0].mxu0
    %v1248 = vpop.f32.mrb[0].mxu0
    %v1249 = vadd.f32 %v241, %v1248
    %v1250 = vpop.f32.mrb[0].mxu0
    %1251 = vmatprep.mubr.bf16.mxu0 %v700
    %1252 = vmatmul.mubr.bf16.gmra.mrb[0].mxu0 %v699
    %v1253 = vpop.f32.mrb[0].mxu0
    %v1254 = vadd.f32 %v241, %v1253
    %v1255 = vpop.f32.mrb[0].mxu0
    %v1256 = vpop.f32.mrb[0].mxu0
    %v1257 = vadd.f32 %v241, %v1256
    %v1258 = vpop.f32.mrb[0].mxu0
    %1259 = vmatprep.mubr.bf16.mxu0 %v704
    %1260 = vmatmul.mubr.bf16.gmra.mrb[0].mxu0 %v703
    %v1261 = vpop.f32.mrb[0].mxu0
    %v1262 = vadd.f32 %v241, %v1261
    %v1263 = vpop.f32.mrb[0].mxu0
    %v1264 = vpop.f32.mrb[0].mxu0
    %v1265 = vadd.f32 %v241, %v1264
    %v1266 = vpop.f32.mrb[0].mxu0
    %1267 = vmatprep.mubr.bf16.mxu0 %v708
    %1268 = vmatmul.mubr.bf16.gmra.mrb[0].mxu0 %v707
    %v1269 = vpop.f32.mrb[0].mxu0
    %v1270 = vadd.f32 %v241, %v1269
    %v1271 = vpop.f32.mrb[0].mxu0
    %v1272 = vpop.f32.mrb[0].mxu0
    %v1273 = vadd.f32 %v241, %v1272
    %v1274 = vpop.f32.mrb[0].mxu0
    %1275 = vmatprep.mubr.bf16.mxu0 %v712
    %1276 = vmatmul.mubr.bf16.gmra.mrb[0].mxu0 %v711
    %v1277 = vpop.f32.mrb[0].mxu0
    %v1278 = vadd.f32 %v241, %v1277
    %v1279 = vpop.f32.mrb[0].mxu0
    %v1280 = vpop.f32.mrb[0].mxu0
    %v1281 = vadd.f32 %v241, %v1280
    %v1282 = vpop.f32.mrb[0].mxu0
    %1283 = vmatprep.mubr.bf16.mxu0 %v716
    %1284 = vmatmul.mubr.bf16.gmra.mrb[0].mxu0 %v715
    %v1285 = vpop.f32.mrb[0].mxu0
    %v1286 = vadd.f32 %v241, %v1285
    %v1287 = vpop.f32.mrb[0].mxu0
    %v1288 = vpop.f32.mrb[0].mxu0
    %v1289 = vadd.f32 %v241, %v1288
    %v1290 = vpop.f32.mrb[0].mxu0
    %1291 = vmatprep.mubr.bf16.mxu0 %v720
    %1292 = vmatmul.mubr.bf16.gmra.mrb[0].mxu0 %v719
    %v1293 = vpop.f32.mrb[0].mxu0
    %v1294 = vadd.f32 %v241, %v1293
    %v1295 = vpop.f32.mrb[0].mxu0
    %v1296 = vpop.f32.mrb[0].mxu0
    %v1297 = vadd.f32 %v241, %v1296
    %v1298 = vpop.f32.mrb[0].mxu0
    %1299 = vmatprep.mubr.bf16.mxu0 %v724
    %1300 = vmatmul.mubr.bf16.gmra.mrb[0].mxu0 %v723
    %v1301 = vpop.f32.mrb[0].mxu0
    %v1302 = vadd.f32 %v241, %v1301
    %v1303 = vpop.f32.mrb[0].mxu0
    %v1304 = vpop.f32.mrb[0].mxu0
    %v1305 = vadd.f32 %v241, %v1304
    %v1306 = vpop.f32.mrb[0].mxu0
    %1307 = vmatprep.mubr.bf16.mxu0 %v728
    %1308 = vmatmul.mubr.bf16.gmra.mrb[0].mxu0 %v727
    %v1309 = vpop.f32.mrb[0].mxu0
    %v1310 = vadd.f32 %v241, %v1309
    %v1311 = vpop.f32.mrb[0].mxu0
    %v1312 = vpop.f32.mrb[0].mxu0
    %v1313 = vadd.f32 %v241, %v1312
    %v1314 = vpop.f32.mrb[0].mxu0
    %1315 = vmatprep.mubr.bf16.mxu0 %v732
    %1316 = vmatmul.mubr.bf16.gmra.mrb[0].mxu0 %v731
    %v1317 = vpop.f32.mrb[0].mxu0
    %v1318 = vadd.f32 %v241, %v1317
    %v1319 = vpop.f32.mrb[0].mxu0
    %v1320 = vpop.f32.mrb[0].mxu0
    %v1321 = vadd.f32 %v241, %v1320
    %v1322 = vpop.f32.mrb[0].mxu0
    %1323 = vmatprep.mubr.bf16.mxu0 %v736
    %1324 = vmatmul.mubr.bf16.gmra.mrb[0].mxu0 %v735
    %v1325 = vpop.f32.mrb[0].mxu0
    %v1326 = vadd.f32 %v241, %v1325
    %v1327 = vpop.f32.mrb[0].mxu0
    %v1328 = vpop.f32.mrb[0].mxu0
    %v1329 = vadd.f32 %v241, %v1328
    %v1330 = vpop.f32.mrb[0].mxu0
    %1331 = vmatprep.mubr.bf16.mxu0 %v740
    %1332 = vmatmul.mubr.bf16.gmra.mrb[0].mxu0 %v739
    %v1333 = vpop.f32.mrb[0].mxu0
    %v1334 = vadd.f32 %v241, %v1333
    %v1335 = vpop.f32.mrb[0].mxu0
    %v1336 = vpop.f32.mrb[0].mxu0
    %v1337 = vadd.f32 %v241, %v1336
    %v1338 = vpop.f32.mrb[0].mxu0
    %1339 = vmatprep.mubr.bf16.mxu0 %v744
    %1340 = vmatmul.mubr.bf16.gmra.mrb[0].mxu0 %v743
    %v1341 = vpop.f32.mrb[0].mxu0
    %v1342 = vadd.f32 %v241, %v1341
    %v1343 = vpop.f32.mrb[0].mxu0
    %v1344 = vpop.f32.mrb[0].mxu0
    %v1345 = vadd.f32 %v241, %v1344
    %v1346 = vpop.f32.mrb[0].mxu0
    %1347 = vmatprep.mubr.bf16.mxu0 %v748
    %1348 = vmatmul.mubr.bf16.gmra.mrb[0].mxu0 %v747
    %v1349 = vpop.f32.mrb[0].mxu0
    %v1350 = vadd.f32 %v241, %v1349
    %v1351 = vpop.f32.mrb[0].mxu0
    %v1352 = vpop.f32.mrb[0].mxu0
    %v1353 = vadd.f32 %v241, %v1352
    %v1354 = vpop.f32.mrb[0].mxu0
    %1355 = vmatprep.mubr.bf16.mxu0 %v752
    %1356 = vmatmul.mubr.bf16.gmra.mrb[0].mxu0 %v751
    %v1357 = vpop.f32.mrb[0].mxu0
    %v1358 = vadd.f32 %v241, %v1357
    %v1359 = vpop.f32.mrb[0].mxu0
    %v1360 = vpop.f32.mrb[0].mxu0
    %v1361 = vadd.f32 %v241, %v1360
    %v1362 = vpop.f32.mrb[0].mxu0
    %1363 = vdwg.mxu0
    %1364 = vmatprep.subr.bf16.mxu0 0
    %1365 = vmatpush1.bf16.msra.mxu0 %v1027
    %1366 = vmatprep.subr.bf16.mxu0 0
    %1367 = vmatpush1.bf16.msra.mxu0 %v1028
    %1368 = vmatprep.subr.bf16.mxu0 0
    %1369 = vmatpush1.bf16.msra.mxu0 %v1029
    %1370 = vmatprep.subr.bf16.mxu0 0
    %1371 = vmatpush1.bf16.msra.mxu0 %v1030
    %1372 = vmatprep.subr.bf16.mxu0 0
    %1373 = vmatpush1.bf16.msra.mxu0 %v1031
    %1374 = vmatprep.subr.bf16.mxu0 0
    %1375 = vmatpush1.bf16.msra.mxu0 %v1032
    %1376 = vmatprep.subr.bf16.mxu0 0
    %1377 = vmatpush1.bf16.msra.mxu0 %v1033
    %1378 = vmatprep.subr.bf16.mxu0 0
    %1379 = vmatpush1.bf16.msra.mxu0 %v1034
    %1380 = vmatprep.subr.bf16.mxu0 0
    %1381 = vmatpush1.bf16.msra.mxu0 %v1035
    %1382 = vmatprep.subr.bf16.mxu0 0
    %1383 = vmatpush1.bf16.msra.mxu0 %v1036
    %1384 = vmatprep.subr.bf16.mxu0 0
    %1385 = vmatpush1.bf16.msra.mxu0 %v1037
    %1386 = vmatprep.subr.bf16.mxu0 0
    %1387 = vmatpush1.bf16.msra.mxu0 %v1038
    %1388 = vmatprep.subr.bf16.mxu0 0
    %1389 = vmatpush1.bf16.msra.mxu0 %v1039
    %1390 = vmatprep.subr.bf16.mxu0 0
    %1391 = vmatpush1.bf16.msra.mxu0 %v1040
    %1392 = vmatprep.subr.bf16.mxu0 0
    %1393 = vmatpush1.bf16.msra.mxu0 %v1041
    %1394 = vmatprep.subr.bf16.mxu0 0
    %1395 = vmatpush1.bf16.msra.mxu0 %v1042
    %1396 = vmatprep.mubr.bf16.mxu0 %v630
    %1397 = vmatmul.mubr.bf16.gmra.mrb[0].mxu0 %v629
    %v1398 = vpop.f32.mrb[0].mxu0
    %v1399 = vadd.f32 %v1110, %v1398
    %v1400 = vpop.f32.mrb[0].mxu0
    %v1401 = vpop.f32.mrb[0].mxu0
    %v1402 = vadd.f32 %v1113, %v1401
    %v1403 = vpop.f32.mrb[0].mxu0
    %1404 = vmatprep.mubr.bf16.mxu0 %v634
    %1405 = vmatmul.mubr.bf16.gmra.mrb[0].mxu0 %v633
    %v1406 = vpop.f32.mrb[0].mxu0
    %v1407 = vadd.f32 %v1118, %v1406
    %v1408 = vpop.f32.mrb[0].mxu0
    %v1409 = vpop.f32.mrb[0].mxu0
    %v1410 = vadd.f32 %v1121, %v1409
    %v1411 = vpop.f32.mrb[0].mxu0
    %1412 = vmatprep.mubr.bf16.mxu0 %v638
    %1413 = vmatmul.mubr.bf16.gmra.mrb[0].mxu0 %v637
    %v1414 = vpop.f32.mrb[0].mxu0
    %v1415 = vadd.f32 %v1126, %v1414
    %v1416 = vpop.f32.mrb[0].mxu0
    %v1417 = vpop.f32.mrb[0].mxu0
    %v1418 = vadd.f32 %v1129, %v1417
    %v1419 = vpop.f32.mrb[0].mxu0
    %1420 = vmatprep.mubr.bf16.mxu0 %v642
    %1421 = vmatmul.mubr.bf16.gmra.mrb[0].mxu0 %v641
    %v1422 = vpop.f32.mrb[0].mxu0
    %v1423 = vadd.f32 %v1134, %v1422
    %v1424 = vpop.f32.mrb[0].mxu0
    %v1425 = vpop.f32.mrb[0].mxu0
    %v1426 = vadd.f32 %v1137, %v1425
    %v1427 = vpop.f32.mrb[0].mxu0
    %1428 = vmatprep.mubr.bf16.mxu0 %v646
    %1429 = vmatmul.mubr.bf16.gmra.mrb[0].mxu0 %v645
    %v1430 = vpop.f32.mrb[0].mxu0
    %v1431 = vadd.f32 %v1142, %v1430
    %v1432 = vpop.f32.mrb[0].mxu0
    %v1433 = vpop.f32.mrb[0].mxu0
    %v1434 = vadd.f32 %v1145, %v1433
    %v1435 = vpop.f32.mrb[0].mxu0
    %1436 = vmatprep.mubr.bf16.mxu0 %v650
    %1437 = vmatmul.mubr.bf16.gmra.mrb[0].mxu0 %v649
    %v1438 = vpop.f32.mrb[0].mxu0
    %v1439 = vadd.f32 %v1150, %v1438
    %v1440 = vpop.f32.mrb[0].mxu0
    %v1441 = vpop.f32.mrb[0].mxu0
    %v1442 = vadd.f32 %v1153, %v1441
    %v1443 = vpop.f32.mrb[0].mxu0
    %1444 = vmatprep.mubr.bf16.mxu0 %v654
    %1445 = vmatmul.mubr.bf16.gmra.mrb[0].mxu0 %v653
    %v1446 = vpop.f32.mrb[0].mxu0
    %v1447 = vadd.f32 %v1158, %v1446
    %v1448 = vpop.f32.mrb[0].mxu0
    %v1449 = vpop.f32.mrb[0].mxu0
    %v1450 = vadd.f32 %v1161, %v1449
    %v1451 = vpop.f32.mrb[0].mxu0
    %1452 = vmatprep.mubr.bf16.mxu0 %v658
    %1453 = vmatmul.mubr.bf16.gmra.mrb[0].mxu0 %v657
    %v1454 = vpop.f32.mrb[0].mxu0
    %v1455 = vadd.f32 %v1166, %v1454
    %v1456 = vpop.f32.mrb[0].mxu0
    %v1457 = vpop.f32.mrb[0].mxu0
    %v1458 = vadd.f32 %v1169, %v1457
    %v1459 = vpop.f32.mrb[0].mxu0
    %1460 = vmatprep.mubr.bf16.mxu0 %v662
    %1461 = vmatmul.mubr.bf16.gmra.mrb[0].mxu0 %v661
    %v1462 = vpop.f32.mrb[0].mxu0
    %v1463 = vadd.f32 %v1174, %v1462
    %v1464 = vpop.f32.mrb[0].mxu0
    %v1465 = vpop.f32.mrb[0].mxu0
    %v1466 = vadd.f32 %v1177, %v1465
    %v1467 = vpop.f32.mrb[0].mxu0
    %1468 = vmatprep.mubr.bf16.mxu0 %v666
    %1469 = vmatmul.mubr.bf16.gmra.mrb[0].mxu0 %v665
    %v1470 = vpop.f32.mrb[0].mxu0
    %v1471 = vadd.f32 %v1182, %v1470
    %v1472 = vpop.f32.mrb[0].mxu0
    %v1473 = vpop.f32.mrb[0].mxu0
    %v1474 = vadd.f32 %v1185, %v1473
    %v1475 = vpop.f32.mrb[0].mxu0
    %1476 = vmatprep.mubr.bf16.mxu0 %v670
    %1477 = vmatmul.mubr.bf16.gmra.mrb[0].mxu0 %v669
    %v1478 = vpop.f32.mrb[0].mxu0
    %v1479 = vadd.f32 %v1190, %v1478
    %v1480 = vpop.f32.mrb[0].mxu0
    %v1481 = vpop.f32.mrb[0].mxu0
    %v1482 = vadd.f32 %v1193, %v1481
    %v1483 = vpop.f32.mrb[0].mxu0
    %1484 = vmatprep.mubr.bf16.mxu0 %v674
    %1485 = vmatmul.mubr.bf16.gmra.mrb[0].mxu0 %v673
    %v1486 = vpop.f32.mrb[0].mxu0
    %v1487 = vadd.f32 %v1198, %v1486
    %v1488 = vpop.f32.mrb[0].mxu0
    %v1489 = vpop.f32.mrb[0].mxu0
    %v1490 = vadd.f32 %v1201, %v1489
    %v1491 = vpop.f32.mrb[0].mxu0
    %1492 = vmatprep.mubr.bf16.mxu0 %v678
    %1493 = vmatmul.mubr.bf16.gmra.mrb[0].mxu0 %v677
    %v1494 = vpop.f32.mrb[0].mxu0
    %v1495 = vadd.f32 %v1206, %v1494
    %v1496 = vpop.f32.mrb[0].mxu0
    %v1497 = vpop.f32.mrb[0].mxu0
    %v1498 = vadd.f32 %v1209, %v1497
    %v1499 = vpop.f32.mrb[0].mxu0
    %1500 = vmatprep.mubr.bf16.mxu0 %v682
    %1501 = vmatmul.mubr.bf16.gmra.mrb[0].mxu0 %v681
    %v1502 = vpop.f32.mrb[0].mxu0
    %v1503 = vadd.f32 %v1214, %v1502
    %v1504 = vpop.f32.mrb[0].mxu0
    %v1505 = vpop.f32.mrb[0].mxu0
    %v1506 = vadd.f32 %v1217, %v1505
    %v1507 = vpop.f32.mrb[0].mxu0
    %1508 = vmatprep.mubr.bf16.mxu0 %v686
    %1509 = vmatmul.mubr.bf16.gmra.mrb[0].mxu0 %v685
    %v1510 = vpop.f32.mrb[0].mxu0
    %v1511 = vadd.f32 %v1222, %v1510
    %v1512 = vpop.f32.mrb[0].mxu0
    %v1513 = vpop.f32.mrb[0].mxu0
    %v1514 = vadd.f32 %v1225, %v1513
    %v1515 = vpop.f32.mrb[0].mxu0
    %1516 = vmatprep.mubr.bf16.mxu0 %v690
    %1517 = vmatmul.mubr.bf16.gmra.mrb[0].mxu0 %v689
    %v1518 = vpop.f32.mrb[0].mxu0
    %v1519 = vadd.f32 %v1230, %v1518
    %v1520 = vpop.f32.mrb[0].mxu0
    %v1521 = vpop.f32.mrb[0].mxu0
    %v1522 = vadd.f32 %v1233, %v1521
    %v1523 = vpop.f32.mrb[0].mxu0
    %1524 = vmatprep.mubr.bf16.mxu0 %v694
    %1525 = vmatmul.mubr.bf16.gmra.mrb[0].mxu0 %v693
    %v1526 = vpop.f32.mrb[0].mxu0
    %v1527 = vadd.f32 %v1238, %v1526
    %v1528 = vpop.f32.mrb[0].mxu0
    %v1529 = vpop.f32.mrb[0].mxu0
    %v1530 = vadd.f32 %v1241, %v1529
    %v1531 = vpop.f32.mrb[0].mxu0
    %1532 = vmatprep.mubr.bf16.mxu0 %v698
    %1533 = vmatmul.mubr.bf16.gmra.mrb[0].mxu0 %v697
    %v1534 = vpop.f32.mrb[0].mxu0
    %v1535 = vadd.f32 %v1246, %v1534
    %v1536 = vpop.f32.mrb[0].mxu0
    %v1537 = vpop.f32.mrb[0].mxu0
    %v1538 = vadd.f32 %v1249, %v1537
    %v1539 = vpop.f32.mrb[0].mxu0
    %1540 = vmatprep.mubr.bf16.mxu0 %v702
    %1541 = vmatmul.mubr.bf16.gmra.mrb[0].mxu0 %v701
    %v1542 = vpop.f32.mrb[0].mxu0
    %v1543 = vadd.f32 %v1254, %v1542
    %v1544 = vpop.f32.mrb[0].mxu0
    %v1545 = vpop.f32.mrb[0].mxu0
    %v1546 = vadd.f32 %v1257, %v1545
    %v1547 = vpop.f32.mrb[0].mxu0
    %1548 = vmatprep.mubr.bf16.mxu0 %v706
    %1549 = vmatmul.mubr.bf16.gmra.mrb[0].mxu0 %v705
    %v1550 = vpop.f32.mrb[0].mxu0
    %v1551 = vadd.f32 %v1262, %v1550
    %v1552 = vpop.f32.mrb[0].mxu0
    %v1553 = vpop.f32.mrb[0].mxu0
    %v1554 = vadd.f32 %v1265, %v1553
    %v1555 = vpop.f32.mrb[0].mxu0
    %1556 = vmatprep.mubr.bf16.mxu0 %v710
    %1557 = vmatmul.mubr.bf16.gmra.mrb[0].mxu0 %v709
    %v1558 = vpop.f32.mrb[0].mxu0
    %v1559 = vadd.f32 %v1270, %v1558
    %v1560 = vpop.f32.mrb[0].mxu0
    %v1561 = vpop.f32.mrb[0].mxu0
    %v1562 = vadd.f32 %v1273, %v1561
    %v1563 = vpop.f32.mrb[0].mxu0
    %1564 = vmatprep.mubr.bf16.mxu0 %v714
    %1565 = vmatmul.mubr.bf16.gmra.mrb[0].mxu0 %v713
    %v1566 = vpop.f32.mrb[0].mxu0
    %v1567 = vadd.f32 %v1278, %v1566
    %v1568 = vpop.f32.mrb[0].mxu0
    %v1569 = vpop.f32.mrb[0].mxu0
    %v1570 = vadd.f32 %v1281, %v1569
    %v1571 = vpop.f32.mrb[0].mxu0
    %1572 = vmatprep.mubr.bf16.mxu0 %v718
    %1573 = vmatmul.mubr.bf16.gmra.mrb[0].mxu0 %v717
    %v1574 = vpop.f32.mrb[0].mxu0
    %v1575 = vadd.f32 %v1286, %v1574
    %v1576 = vpop.f32.mrb[0].mxu0
    %v1577 = vpop.f32.mrb[0].mxu0
    %v1578 = vadd.f32 %v1289, %v1577
    %v1579 = vpop.f32.mrb[0].mxu0
    %1580 = vmatprep.mubr.bf16.mxu0 %v722
    %1581 = vmatmul.mubr.bf16.gmra.mrb[0].mxu0 %v721
    %v1582 = vpop.f32.mrb[0].mxu0
    %v1583 = vadd.f32 %v1294, %v1582
    %v1584 = vpop.f32.mrb[0].mxu0
    %v1585 = vpop.f32.mrb[0].mxu0
    %v1586 = vadd.f32 %v1297, %v1585
    %v1587 = vpop.f32.mrb[0].mxu0
    %1588 = vmatprep.mubr.bf16.mxu0 %v726
    %1589 = vmatmul.mubr.bf16.gmra.mrb[0].mxu0 %v725
    %v1590 = vpop.f32.mrb[0].mxu0
    %v1591 = vadd.f32 %v1302, %v1590
    %v1592 = vpop.f32.mrb[0].mxu0
    %v1593 = vpop.f32.mrb[0].mxu0
    %v1594 = vadd.f32 %v1305, %v1593
    %v1595 = vpop.f32.mrb[0].mxu0
    %1596 = vmatprep.mubr.bf16.mxu0 %v730
    %1597 = vmatmul.mubr.bf16.gmra.mrb[0].mxu0 %v729
    %v1598 = vpop.f32.mrb[0].mxu0
    %v1599 = vadd.f32 %v1310, %v1598
    %v1600 = vpop.f32.mrb[0].mxu0
    %v1601 = vpop.f32.mrb[0].mxu0
    %v1602 = vadd.f32 %v1313, %v1601
    %v1603 = vpop.f32.mrb[0].mxu0
    %1604 = vmatprep.mubr.bf16.mxu0 %v734
    %1605 = vmatmul.mubr.bf16.gmra.mrb[0].mxu0 %v733
    %v1606 = vpop.f32.mrb[0].mxu0
    %v1607 = vadd.f32 %v1318, %v1606
    %v1608 = vpop.f32.mrb[0].mxu0
    %v1609 = vpop.f32.mrb[0].mxu0
    %v1610 = vadd.f32 %v1321, %v1609
    %v1611 = vpop.f32.mrb[0].mxu0
    %1612 = vmatprep.mubr.bf16.mxu0 %v738
    %1613 = vmatmul.mubr.bf16.gmra.mrb[0].mxu0 %v737
    %v1614 = vpop.f32.mrb[0].mxu0
    %v1615 = vadd.f32 %v1326, %v1614
    %v1616 = vpop.f32.mrb[0].mxu0
    %v1617 = vpop.f32.mrb[0].mxu0
    %v1618 = vadd.f32 %v1329, %v1617
    %v1619 = vpop.f32.mrb[0].mxu0
    %1620 = vmatprep.mubr.bf16.mxu0 %v742
    %1621 = vmatmul.mubr.bf16.gmra.mrb[0].mxu0 %v741
    %v1622 = vpop.f32.mrb[0].mxu0
    %v1623 = vadd.f32 %v1334, %v1622
    %v1624 = vpop.f32.mrb[0].mxu0
    %v1625 = vpop.f32.mrb[0].mxu0
    %v1626 = vadd.f32 %v1337, %v1625
    %v1627 = vpop.f32.mrb[0].mxu0
    %1628 = vmatprep.mubr.bf16.mxu0 %v746
    %1629 = vmatmul.mubr.bf16.gmra.mrb[0].mxu0 %v745
    %v1630 = vpop.f32.mrb[0].mxu0
    %v1631 = vadd.f32 %v1342, %v1630
    %v1632 = vpop.f32.mrb[0].mxu0
    %v1633 = vpop.f32.mrb[0].mxu0
    %v1634 = vadd.f32 %v1345, %v1633
    %v1635 = vpop.f32.mrb[0].mxu0
    %1636 = vmatprep.mubr.bf16.mxu0 %v750
    %1637 = vmatmul.mubr.bf16.gmra.mrb[0].mxu0 %v749
    %v1638 = vpop.f32.mrb[0].mxu0
    %v1639 = vadd.f32 %v1350, %v1638
    %v1640 = vpop.f32.mrb[0].mxu0
    %v1641 = vpop.f32.mrb[0].mxu0
    %v1642 = vadd.f32 %v1353, %v1641
    %v1643 = vpop.f32.mrb[0].mxu0
    %1644 = vmatprep.mubr.bf16.mxu0 %v754
    %1645 = vmatmul.mubr.bf16.gmra.mrb[0].mxu0 %v753
    %v1646 = vpop.f32.mrb[0].mxu0
    %v1647 = vadd.f32 %v1358, %v1646
    %v1648 = vpop.f32.mrb[0].mxu0
    %v1649 = vpop.f32.mrb[0].mxu0
    %v1650 = vadd.f32 %v1361, %v1649
    %v1651 = vpop.f32.mrb[0].mxu0
    %1652 = vdwg.mxu0
    %v1653 = vmax.f32 %v1399, 0.0
    %v1654 = vmax.f32 %v1402, 0.0
    %v1655 = vmax.f32 %v1407, 0.0
    %v1656 = vmax.f32 %v1410, 0.0
    %v1657 = vmax.f32 %v1415, 0.0
    %v1658 = vmax.f32 %v1418, 0.0
    %v1659 = vmax.f32 %v1423, 0.0
    %v1660 = vmax.f32 %v1426, 0.0
    %v1661 = vmax.f32 %v1431, 0.0
    %v1662 = vmax.f32 %v1434, 0.0
    %v1663 = vmax.f32 %v1439, 0.0
    %v1664 = vmax.f32 %v1442, 0.0
    %v1665 = vmax.f32 %v1447, 0.0
    %v1666 = vmax.f32 %v1450, 0.0
    %v1667 = vmax.f32 %v1455, 0.0
    %v1668 = vmax.f32 %v1458, 0.0
    %v1669 = vmax.f32 %v1463, 0.0
    %v1670 = vmax.f32 %v1466, 0.0
    %v1671 = vmax.f32 %v1471, 0.0
    %v1672 = vmax.f32 %v1474, 0.0
    %v1673 = vmax.f32 %v1479, 0.0
    %v1674 = vmax.f32 %v1482, 0.0
    %v1675 = vmax.f32 %v1487, 0.0
    %v1676 = vmax.f32 %v1490, 0.0
    %v1677 = vmax.f32 %v1495, 0.0
    %v1678 = vmax.f32 %v1498, 0.0
    %v1679 = vmax.f32 %v1503, 0.0
    %v1680 = vmax.f32 %v1506, 0.0
    %v1681 = vmax.f32 %v1511, 0.0
    %v1682 = vmax.f32 %v1514, 0.0
    %v1683 = vmax.f32 %v1519, 0.0
    %v1684 = vmax.f32 %v1522, 0.0
    %v1685 = vmax.f32 %v1527, 0.0
    %v1686 = vmax.f32 %v1530, 0.0
    %v1687 = vmax.f32 %v1535, 0.0
    %v1688 = vmax.f32 %v1538, 0.0
    %v1689 = vmax.f32 %v1543, 0.0
    %v1690 = vmax.f32 %v1546, 0.0
    %v1691 = vmax.f32 %v1551, 0.0
    %v1692 = vmax.f32 %v1554, 0.0
    %v1693 = vmax.f32 %v1559, 0.0
    %v1694 = vmax.f32 %v1562, 0.0
    %v1695 = vmax.f32 %v1567, 0.0
    %v1696 = vmax.f32 %v1570, 0.0
    %v1697 = vmax.f32 %v1575, 0.0
    %v1698 = vmax.f32 %v1578, 0.0
    %v1699 = vmax.f32 %v1583, 0.0
    %v1700 = vmax.f32 %v1586, 0.0
    %v1701 = vmax.f32 %v1591, 0.0
    %v1702 = vmax.f32 %v1594, 0.0
    %v1703 = vmax.f32 %v1599, 0.0
    %v1704 = vmax.f32 %v1602, 0.0
    %v1705 = vmax.f32 %v1607, 0.0
    %v1706 = vmax.f32 %v1610, 0.0
    %v1707 = vmax.f32 %v1615, 0.0
    %v1708 = vmax.f32 %v1618, 0.0
    %v1709 = vmax.f32 %v1623, 0.0
    %v1710 = vmax.f32 %v1626, 0.0
    %v1711 = vmax.f32 %v1631, 0.0
    %v1712 = vmax.f32 %v1634, 0.0
    %v1713 = vmax.f32 %v1639, 0.0
    %v1714 = vmax.f32 %v1642, 0.0
    %v1715 = vmax.f32 %v1647, 0.0
    %v1716 = vmax.f32 %v1650, 0.0
    %v1717 = vpack.c.bf16 %v1654, %v1653
    %v1718 = vpack.c.bf16 %v1656, %v1655
    %v1719 = vpack.c.bf16 %v1658, %v1657
    %v1720 = vpack.c.bf16 %v1660, %v1659
    %v1721 = vpack.c.bf16 %v1662, %v1661
    %v1722 = vpack.c.bf16 %v1664, %v1663
    %v1723 = vpack.c.bf16 %v1666, %v1665
    %v1724 = vpack.c.bf16 %v1668, %v1667
    %v1725 = vpack.c.bf16 %v1670, %v1669
    %v1726 = vpack.c.bf16 %v1672, %v1671
    %v1727 = vpack.c.bf16 %v1674, %v1673
    %v1728 = vpack.c.bf16 %v1676, %v1675
    %v1729 = vpack.c.bf16 %v1678, %v1677
    %v1730 = vpack.c.bf16 %v1680, %v1679
    %v1731 = vpack.c.bf16 %v1682, %v1681
    %v1732 = vpack.c.bf16 %v1684, %v1683
    %v1733 = vpack.c.bf16 %v1686, %v1685
    %v1734 = vpack.c.bf16 %v1688, %v1687
    %v1735 = vpack.c.bf16 %v1690, %v1689
    %v1736 = vpack.c.bf16 %v1692, %v1691
    %v1737 = vpack.c.bf16 %v1694, %v1693
    %v1738 = vpack.c.bf16 %v1696, %v1695
    %v1739 = vpack.c.bf16 %v1698, %v1697
    %v1740 = vpack.c.bf16 %v1700, %v1699
    %v1741 = vpack.c.bf16 %v1702, %v1701
    %v1742 = vpack.c.bf16 %v1704, %v1703
    %v1743 = vpack.c.bf16 %v1706, %v1705
    %v1744 = vpack.c.bf16 %v1708, %v1707
    %v1745 = vpack.c.bf16 %v1710, %v1709
    %v1746 = vpack.c.bf16 %v1712, %v1711
    %v1747 = vpack.c.bf16 %v1714, %v1713
    %v1748 = vpack.c.bf16 %v1716, %v1715
    %1749 = vmatprep.subr.bf16.mxu0 0
    %1750 = vmatpush1.bf16.msra.mxu0 %v1717
    %1751 = vmatprep.subr.bf16.mxu0 0
    %1752 = vmatpush1.bf16.msra.mxu0 %v1718
    %1753 = vmatprep.subr.bf16.mxu0 0
    %1754 = vmatpush1.bf16.msra.mxu0 %v1719
    %1755 = vmatprep.subr.bf16.mxu0 0
    %1756 = vmatpush1.bf16.msra.mxu0 %v1720
    %1757 = vmatprep.subr.bf16.mxu0 0
    %1758 = vmatpush1.bf16.msra.mxu0 %v1721
    %1759 = vmatprep.subr.bf16.mxu0 0
    %1760 = vmatpush1.bf16.msra.mxu0 %v1722
    %1761 = vmatprep.subr.bf16.mxu0 0
    %1762 = vmatpush1.bf16.msra.mxu0 %v1723
    %1763 = vmatprep.subr.bf16.mxu0 0
    %1764 = vmatpush1.bf16.msra.mxu0 %v1724
    %1765 = vmatprep.subr.bf16.mxu0 0
    %1766 = vmatpush1.bf16.msra.mxu0 %v1725
    %1767 = vmatprep.subr.bf16.mxu0 0
    %1768 = vmatpush1.bf16.msra.mxu0 %v1726
    %1769 = vmatprep.subr.bf16.mxu0 0
    %1770 = vmatpush1.bf16.msra.mxu0 %v1727
    %1771 = vmatprep.subr.bf16.mxu0 0
    %1772 = vmatpush1.bf16.msra.mxu0 %v1728
    %1773 = vmatprep.subr.bf16.mxu0 0
    %1774 = vmatpush1.bf16.msra.mxu0 %v1729
    %1775 = vmatprep.subr.bf16.mxu0 0
    %1776 = vmatpush1.bf16.msra.mxu0 %v1730
    %1777 = vmatprep.subr.bf16.mxu0 0
    %1778 = vmatpush1.bf16.msra.mxu0 %v1731
    %1779 = vmatprep.subr.bf16.mxu0 0
    %1780 = vmatpush1.bf16.msra.mxu0 %v1732
    %1781 = vmatprep.mubr.bf16.mxu0 %v628
    %1782 = vmatmul.mubr.bf16.gmra.mrb[0].mxu0 %v627
    %v1783 = vpop.f32.mrb[0].mxu0
    %v1784 = vadd.f32 0.0, %v1783
    %v1785 = vpop.f32.mrb[0].mxu0
    %v1786 = vpop.f32.mrb[0].mxu0
    %v1787 = vadd.f32 0.0, %v1786
    %v1788 = vpop.f32.mrb[0].mxu0
    %1789 = vmatprep.mubr.bf16.mxu0 %v632
    %1790 = vmatmul.mubr.bf16.gmra.mrb[0].mxu0 %v631
    %v1791 = vpop.f32.mrb[0].mxu0
    %v1792 = vadd.f32 0.0, %v1791
    %v1793 = vpop.f32.mrb[0].mxu0
    %v1794 = vpop.f32.mrb[0].mxu0
    %v1795 = vadd.f32 0.0, %v1794
    %v1796 = vpop.f32.mrb[0].mxu0
    %1797 = vmatprep.mubr.bf16.mxu0 %v636
    %1798 = vmatmul.mubr.bf16.gmra.mrb[0].mxu0 %v635
    %v1799 = vpop.f32.mrb[0].mxu0
    %v1800 = vadd.f32 0.0, %v1799
    %v1801 = vpop.f32.mrb[0].mxu0
    %v1802 = vpop.f32.mrb[0].mxu0
    %v1803 = vadd.f32 0.0, %v1802
    %v1804 = vpop.f32.mrb[0].mxu0
    %1805 = vmatprep.mubr.bf16.mxu0 %v640
    %1806 = vmatmul.mubr.bf16.gmra.mrb[0].mxu0 %v639
    %v1807 = vpop.f32.mrb[0].mxu0
    %v1808 = vadd.f32 0.0, %v1807
    %v1809 = vpop.f32.mrb[0].mxu0
    %v1810 = vpop.f32.mrb[0].mxu0
    %v1811 = vadd.f32 0.0, %v1810
    %v1812 = vpop.f32.mrb[0].mxu0
    %1813 = vmatprep.mubr.bf16.mxu0 %v644
    %1814 = vmatmul.mubr.bf16.gmra.mrb[0].mxu0 %v643
    %v1815 = vpop.f32.mrb[0].mxu0
    %v1816 = vadd.f32 0.0, %v1815
    %v1817 = vpop.f32.mrb[0].mxu0
    %v1818 = vpop.f32.mrb[0].mxu0
    %v1819 = vadd.f32 0.0, %v1818
    %v1820 = vpop.f32.mrb[0].mxu0
    %1821 = vmatprep.mubr.bf16.mxu0 %v648
    %1822 = vmatmul.mubr.bf16.gmra.mrb[0].mxu0 %v647
    %v1823 = vpop.f32.mrb[0].mxu0
    %v1824 = vadd.f32 0.0, %v1823
    %v1825 = vpop.f32.mrb[0].mxu0
    %v1826 = vpop.f32.mrb[0].mxu0
    %v1827 = vadd.f32 0.0, %v1826
    %v1828 = vpop.f32.mrb[0].mxu0
    %1829 = vmatprep.mubr.bf16.mxu0 %v652
    %1830 = vmatmul.mubr.bf16.gmra.mrb[0].mxu0 %v651
    %v1831 = vpop.f32.mrb[0].mxu0
    %v1832 = vadd.f32 0.0, %v1831
    %v1833 = vpop.f32.mrb[0].mxu0
    %v1834 = vpop.f32.mrb[0].mxu0
    %v1835 = vadd.f32 0.0, %v1834
    %v1836 = vpop.f32.mrb[0].mxu0
    %1837 = vmatprep.mubr.bf16.mxu0 %v656
    %1838 = vmatmul.mubr.bf16.gmra.mrb[0].mxu0 %v655
    %v1839 = vpop.f32.mrb[0].mxu0
    %v1840 = vadd.f32 0.0, %v1839
    %v1841 = vpop.f32.mrb[0].mxu0
    %v1842 = vpop.f32.mrb[0].mxu0
    %v1843 = vadd.f32 0.0, %v1842
    %v1844 = vpop.f32.mrb[0].mxu0
    %1845 = vmatprep.mubr.bf16.mxu0 %v660
    %1846 = vmatmul.mubr.bf16.gmra.mrb[0].mxu0 %v659
    %v1847 = vpop.f32.mrb[0].mxu0
    %v1848 = vadd.f32 0.0, %v1847
    %v1849 = vpop.f32.mrb[0].mxu0
    %v1850 = vpop.f32.mrb[0].mxu0
    %v1851 = vadd.f32 0.0, %v1850
    %v1852 = vpop.f32.mrb[0].mxu0
    %1853 = vmatprep.mubr.bf16.mxu0 %v664
    %1854 = vmatmul.mubr.bf16.gmra.mrb[0].mxu0 %v663
    %v1855 = vpop.f32.mrb[0].mxu0
    %v1856 = vadd.f32 0.0, %v1855
    %v1857 = vpop.f32.mrb[0].mxu0
    %v1858 = vpop.f32.mrb[0].mxu0
    %v1859 = vadd.f32 0.0, %v1858
    %v1860 = vpop.f32.mrb[0].mxu0
    %1861 = vmatprep.mubr.bf16.mxu0 %v668
    %1862 = vmatmul.mubr.bf16.gmra.mrb[0].mxu0 %v667
    %v1863 = vpop.f32.mrb[0].mxu0
    %v1864 = vadd.f32 0.0, %v1863
    %v1865 = vpop.f32.mrb[0].mxu0
    %v1866 = vpop.f32.mrb[0].mxu0
    %v1867 = vadd.f32 0.0, %v1866
    %v1868 = vpop.f32.mrb[0].mxu0
    %1869 = vmatprep.mubr.bf16.mxu0 %v672
    %1870 = vmatmul.mubr.bf16.gmra.mrb[0].mxu0 %v671
    %v1871 = vpop.f32.mrb[0].mxu0
    %v1872 = vadd.f32 0.0, %v1871
    %v1873 = vpop.f32.mrb[0].mxu0
    %v1874 = vpop.f32.mrb[0].mxu0
    %v1875 = vadd.f32 0.0, %v1874
    %v1876 = vpop.f32.mrb[0].mxu0
    %1877 = vmatprep.mubr.bf16.mxu0 %v676
    %1878 = vmatmul.mubr.bf16.gmra.mrb[0].mxu0 %v675
    %v1879 = vpop.f32.mrb[0].mxu0
    %v1880 = vadd.f32 0.0, %v1879
    %v1881 = vpop.f32.mrb[0].mxu0
    %v1882 = vpop.f32.mrb[0].mxu0
    %v1883 = vadd.f32 0.0, %v1882
    %v1884 = vpop.f32.mrb[0].mxu0
    %1885 = vmatprep.mubr.bf16.mxu0 %v680
    %1886 = vmatmul.mubr.bf16.gmra.mrb[0].mxu0 %v679
    %v1887 = vpop.f32.mrb[0].mxu0
    %v1888 = vadd.f32 0.0, %v1887
    %v1889 = vpop.f32.mrb[0].mxu0
    %v1890 = vpop.f32.mrb[0].mxu0
    %v1891 = vadd.f32 0.0, %v1890
    %v1892 = vpop.f32.mrb[0].mxu0
    %1893 = vmatprep.mubr.bf16.mxu0 %v684
    %1894 = vmatmul.mubr.bf16.gmra.mrb[0].mxu0 %v683
    %v1895 = vpop.f32.mrb[0].mxu0
    %v1896 = vadd.f32 0.0, %v1895
    %v1897 = vpop.f32.mrb[0].mxu0
    %v1898 = vpop.f32.mrb[0].mxu0
    %v1899 = vadd.f32 0.0, %v1898
    %v1900 = vpop.f32.mrb[0].mxu0
    %1901 = vmatprep.mubr.bf16.mxu0 %v688
    %1902 = vmatmul.mubr.bf16.gmra.mrb[0].mxu0 %v687
    %v1903 = vpop.f32.mrb[0].mxu0
    %v1904 = vadd.f32 0.0, %v1903
    %v1905 = vpop.f32.mrb[0].mxu0
    %v1906 = vpop.f32.mrb[0].mxu0
    %v1907 = vadd.f32 0.0, %v1906
    %v1908 = vpop.f32.mrb[0].mxu0
    %1909 = vmatprep.mubr.bf16.mxu0 %v692
    %1910 = vmatmul.mubr.bf16.gmra.mrb[0].mxu0 %v691
    %v1911 = vpop.f32.mrb[0].mxu0
    %v1912 = vadd.f32 0.0, %v1911
    %v1913 = vpop.f32.mrb[0].mxu0
    %v1914 = vpop.f32.mrb[0].mxu0
    %v1915 = vadd.f32 0.0, %v1914
    %v1916 = vpop.f32.mrb[0].mxu0
    %1917 = vmatprep.mubr.bf16.mxu0 %v696
    %1918 = vmatmul.mubr.bf16.gmra.mrb[0].mxu0 %v695
    %v1919 = vpop.f32.mrb[0].mxu0
    %v1920 = vadd.f32 0.0, %v1919
    %v1921 = vpop.f32.mrb[0].mxu0
    %v1922 = vpop.f32.mrb[0].mxu0
    %v1923 = vadd.f32 0.0, %v1922
    %v1924 = vpop.f32.mrb[0].mxu0
    %1925 = vmatprep.mubr.bf16.mxu0 %v700
    %1926 = vmatmul.mubr.bf16.gmra.mrb[0].mxu0 %v699
    %v1927 = vpop.f32.mrb[0].mxu0
    %v1928 = vadd.f32 0.0, %v1927
    %v1929 = vpop.f32.mrb[0].mxu0
    %v1930 = vpop.f32.mrb[0].mxu0
    %v1931 = vadd.f32 0.0, %v1930
    %v1932 = vpop.f32.mrb[0].mxu0
    %1933 = vmatprep.mubr.bf16.mxu0 %v704
    %1934 = vmatmul.mubr.bf16.gmra.mrb[0].mxu0 %v703
    %v1935 = vpop.f32.mrb[0].mxu0
    %v1936 = vadd.f32 0.0, %v1935
    %v1937 = vpop.f32.mrb[0].mxu0
    %v1938 = vpop.f32.mrb[0].mxu0
    %v1939 = vadd.f32 0.0, %v1938
    %v1940 = vpop.f32.mrb[0].mxu0
    %1941 = vmatprep.mubr.bf16.mxu0 %v708
    %1942 = vmatmul.mubr.bf16.gmra.mrb[0].mxu0 %v707
    %v1943 = vpop.f32.mrb[0].mxu0
    %v1944 = vadd.f32 0.0, %v1943
    %v1945 = vpop.f32.mrb[0].mxu0
    %v1946 = vpop.f32.mrb[0].mxu0
    %v1947 = vadd.f32 0.0, %v1946
    %v1948 = vpop.f32.mrb[0].mxu0
    %1949 = vmatprep.mubr.bf16.mxu0 %v712
    %1950 = vmatmul.mubr.bf16.gmra.mrb[0].mxu0 %v711
    %v1951 = vpop.f32.mrb[0].mxu0
    %v1952 = vadd.f32 0.0, %v1951
    %v1953 = vpop.f32.mrb[0].mxu0
    %v1954 = vpop.f32.mrb[0].mxu0
    %v1955 = vadd.f32 0.0, %v1954
    %v1956 = vpop.f32.mrb[0].mxu0
    %1957 = vmatprep.mubr.bf16.mxu0 %v716
    %1958 = vmatmul.mubr.bf16.gmra.mrb[0].mxu0 %v715
    %v1959 = vpop.f32.mrb[0].mxu0
    %v1960 = vadd.f32 0.0, %v1959
    %v1961 = vpop.f32.mrb[0].mxu0
    %v1962 = vpop.f32.mrb[0].mxu0
    %v1963 = vadd.f32 0.0, %v1962
    %v1964 = vpop.f32.mrb[0].mxu0
    %1965 = vmatprep.mubr.bf16.mxu0 %v720
    %1966 = vmatmul.mubr.bf16.gmra.mrb[0].mxu0 %v719
    %v1967 = vpop.f32.mrb[0].mxu0
    %v1968 = vadd.f32 0.0, %v1967
    %v1969 = vpop.f32.mrb[0].mxu0
    %v1970 = vpop.f32.mrb[0].mxu0
    %v1971 = vadd.f32 0.0, %v1970
    %v1972 = vpop.f32.mrb[0].mxu0
    %1973 = vmatprep.mubr.bf16.mxu0 %v724
    %1974 = vmatmul.mubr.bf16.gmra.mrb[0].mxu0 %v723
    %v1975 = vpop.f32.mrb[0].mxu0
    %v1976 = vadd.f32 0.0, %v1975
    %v1977 = vpop.f32.mrb[0].mxu0
    %v1978 = vpop.f32.mrb[0].mxu0
    %v1979 = vadd.f32 0.0, %v1978
    %v1980 = vpop.f32.mrb[0].mxu0
    %1981 = vmatprep.mubr.bf16.mxu0 %v728
    %1982 = vmatmul.mubr.bf16.gmra.mrb[0].mxu0 %v727
    %v1983 = vpop.f32.mrb[0].mxu0
    %v1984 = vadd.f32 0.0, %v1983
    %v1985 = vpop.f32.mrb[0].mxu0
    %v1986 = vpop.f32.mrb[0].mxu0
    %v1987 = vadd.f32 0.0, %v1986
    %v1988 = vpop.f32.mrb[0].mxu0
    %1989 = vmatprep.mubr.bf16.mxu0 %v732
    %1990 = vmatmul.mubr.bf16.gmra.mrb[0].mxu0 %v731
    %v1991 = vpop.f32.mrb[0].mxu0
    %v1992 = vadd.f32 0.0, %v1991
    %v1993 = vpop.f32.mrb[0].mxu0
    %v1994 = vpop.f32.mrb[0].mxu0
    %v1995 = vadd.f32 0.0, %v1994
    %v1996 = vpop.f32.mrb[0].mxu0
    %1997 = vmatprep.mubr.bf16.mxu0 %v736
    %1998 = vmatmul.mubr.bf16.gmra.mrb[0].mxu0 %v735
    %v1999 = vpop.f32.mrb[0].mxu0
    %v2000 = vadd.f32 0.0, %v1999
    %v2001 = vpop.f32.mrb[0].mxu0
    %v2002 = vpop.f32.mrb[0].mxu0
    %v2003 = vadd.f32 0.0, %v2002
    %v2004 = vpop.f32.mrb[0].mxu0
    %2005 = vmatprep.mubr.bf16.mxu0 %v740
    %2006 = vmatmul.mubr.bf16.gmra.mrb[0].mxu0 %v739
    %v2007 = vpop.f32.mrb[0].mxu0
    %v2008 = vadd.f32 0.0, %v2007
    %v2009 = vpop.f32.mrb[0].mxu0
    %v2010 = vpop.f32.mrb[0].mxu0
    %v2011 = vadd.f32 0.0, %v2010
    %v2012 = vpop.f32.mrb[0].mxu0
    %2013 = vmatprep.mubr.bf16.mxu0 %v744
    %2014 = vmatmul.mubr.bf16.gmra.mrb[0].mxu0 %v743
    %v2015 = vpop.f32.mrb[0].mxu0
    %v2016 = vadd.f32 0.0, %v2015
    %v2017 = vpop.f32.mrb[0].mxu0
    %v2018 = vpop.f32.mrb[0].mxu0
    %v2019 = vadd.f32 0.0, %v2018
    %v2020 = vpop.f32.mrb[0].mxu0
    %2021 = vmatprep.mubr.bf16.mxu0 %v748
    %2022 = vmatmul.mubr.bf16.gmra.mrb[0].mxu0 %v747
    %v2023 = vpop.f32.mrb[0].mxu0
    %v2024 = vadd.f32 0.0, %v2023
    %v2025 = vpop.f32.mrb[0].mxu0
    %v2026 = vpop.f32.mrb[0].mxu0
    %v2027 = vadd.f32 0.0, %v2026
    %v2028 = vpop.f32.mrb[0].mxu0
    %2029 = vmatprep.mubr.bf16.mxu0 %v752
    %2030 = vmatmul.mubr.bf16.gmra.mrb[0].mxu0 %v751
    %v2031 = vpop.f32.mrb[0].mxu0
    %v2032 = vadd.f32 0.0, %v2031
    %v2033 = vpop.f32.mrb[0].mxu0
    %v2034 = vpop.f32.mrb[0].mxu0
    %v2035 = vadd.f32 0.0, %v2034
    %v2036 = vpop.f32.mrb[0].mxu0
    %2037 = vdwg.mxu0
    %2038 = vmatprep.subr.bf16.mxu0 0
    %2039 = vmatpush1.bf16.msra.mxu0 %v1733
    %2040 = vmatprep.subr.bf16.mxu0 0
    %2041 = vmatpush1.bf16.msra.mxu0 %v1734
    %2042 = vmatprep.subr.bf16.mxu0 0
    %2043 = vmatpush1.bf16.msra.mxu0 %v1735
    %2044 = vmatprep.subr.bf16.mxu0 0
    %2045 = vmatpush1.bf16.msra.mxu0 %v1736
    %2046 = vmatprep.subr.bf16.mxu0 0
    %2047 = vmatpush1.bf16.msra.mxu0 %v1737
    %2048 = vmatprep.subr.bf16.mxu0 0
    %2049 = vmatpush1.bf16.msra.mxu0 %v1738
    %2050 = vmatprep.subr.bf16.mxu0 0
    %2051 = vmatpush1.bf16.msra.mxu0 %v1739
    %2052 = vmatprep.subr.bf16.mxu0 0
    %2053 = vmatpush1.bf16.msra.mxu0 %v1740
    %2054 = vmatprep.subr.bf16.mxu0 0
    %2055 = vmatpush1.bf16.msra.mxu0 %v1741
    %2056 = vmatprep.subr.bf16.mxu0 0
    %2057 = vmatpush1.bf16.msra.mxu0 %v1742
    %2058 = vmatprep.subr.bf16.mxu0 0
    %2059 = vmatpush1.bf16.msra.mxu0 %v1743
    %2060 = vmatprep.subr.bf16.mxu0 0
    %2061 = vmatpush1.bf16.msra.mxu0 %v1744
    %2062 = vmatprep.subr.bf16.mxu0 0
    %2063 = vmatpush1.bf16.msra.mxu0 %v1745
    %2064 = vmatprep.subr.bf16.mxu0 0
    %2065 = vmatpush1.bf16.msra.mxu0 %v1746
    %2066 = vmatprep.subr.bf16.mxu0 0
    %2067 = vmatpush1.bf16.msra.mxu0 %v1747
    %2068 = vmatprep.subr.bf16.mxu0 0
    %2069 = vmatpush1.bf16.msra.mxu0 %v1748
    %2070 = vmatprep.mubr.bf16.mxu0 %v630
    %2071 = vmatmul.mubr.bf16.gmra.mrb[0].mxu0 %v629
    %v2072 = vpop.f32.mrb[0].mxu0
    %v2073 = vadd.f32 %v1784, %v2072
    %v2074 = vpop.f32.mrb[0].mxu0
    %v2075 = vpop.f32.mrb[0].mxu0
    %v2076 = vadd.f32 %v1787, %v2075
    %v2077 = vpop.f32.mrb[0].mxu0
    %2078 = vmatprep.mubr.bf16.mxu0 %v634
    %2079 = vmatmul.mubr.bf16.gmra.mrb[0].mxu0 %v633
    %v2080 = vpop.f32.mrb[0].mxu0
    %v2081 = vadd.f32 %v1792, %v2080
    %v2082 = vpop.f32.mrb[0].mxu0
    %v2083 = vpop.f32.mrb[0].mxu0
    %v2084 = vadd.f32 %v1795, %v2083
    %v2085 = vpop.f32.mrb[0].mxu0
    %2086 = vmatprep.mubr.bf16.mxu0 %v638
    %2087 = vmatmul.mubr.bf16.gmra.mrb[0].mxu0 %v637
    %v2088 = vpop.f32.mrb[0].mxu0
    %v2089 = vadd.f32 %v1800, %v2088
    %v2090 = vpop.f32.mrb[0].mxu0
    %v2091 = vpop.f32.mrb[0].mxu0
    %v2092 = vadd.f32 %v1803, %v2091
    %v2093 = vpop.f32.mrb[0].mxu0
    %2094 = vmatprep.mubr.bf16.mxu0 %v642
    %2095 = vmatmul.mubr.bf16.gmra.mrb[0].mxu0 %v641
    %v2096 = vpop.f32.mrb[0].mxu0
    %v2097 = vadd.f32 %v1808, %v2096
    %v2098 = vpop.f32.mrb[0].mxu0
    %v2099 = vpop.f32.mrb[0].mxu0
    %v2100 = vadd.f32 %v1811, %v2099
    %v2101 = vpop.f32.mrb[0].mxu0
    %2102 = vmatprep.mubr.bf16.mxu0 %v646
    %2103 = vmatmul.mubr.bf16.gmra.mrb[0].mxu0 %v645
    %v2104 = vpop.f32.mrb[0].mxu0
    %v2105 = vadd.f32 %v1816, %v2104
    %v2106 = vpop.f32.mrb[0].mxu0
    %v2107 = vpop.f32.mrb[0].mxu0
    %v2108 = vadd.f32 %v1819, %v2107
    %v2109 = vpop.f32.mrb[0].mxu0
    %2110 = vmatprep.mubr.bf16.mxu0 %v650
    %2111 = vmatmul.mubr.bf16.gmra.mrb[0].mxu0 %v649
    %v2112 = vpop.f32.mrb[0].mxu0
    %v2113 = vadd.f32 %v1824, %v2112
    %v2114 = vpop.f32.mrb[0].mxu0
    %v2115 = vpop.f32.mrb[0].mxu0
    %v2116 = vadd.f32 %v1827, %v2115
    %v2117 = vpop.f32.mrb[0].mxu0
    %2118 = vmatprep.mubr.bf16.mxu0 %v654
    %2119 = vmatmul.mubr.bf16.gmra.mrb[0].mxu0 %v653
    %v2120 = vpop.f32.mrb[0].mxu0
    %v2121 = vadd.f32 %v1832, %v2120
    %v2122 = vpop.f32.mrb[0].mxu0
    %v2123 = vpop.f32.mrb[0].mxu0
    %v2124 = vadd.f32 %v1835, %v2123
    %v2125 = vpop.f32.mrb[0].mxu0
    %2126 = vmatprep.mubr.bf16.mxu0 %v658
    %2127 = vmatmul.mubr.bf16.gmra.mrb[0].mxu0 %v657
    %v2128 = vpop.f32.mrb[0].mxu0
    %v2129 = vadd.f32 %v1840, %v2128
    %v2130 = vpop.f32.mrb[0].mxu0
    %v2131 = vpop.f32.mrb[0].mxu0
    %v2132 = vadd.f32 %v1843, %v2131
    %v2133 = vpop.f32.mrb[0].mxu0
    %2134 = vmatprep.mubr.bf16.mxu0 %v662
    %2135 = vmatmul.mubr.bf16.gmra.mrb[0].mxu0 %v661
    %v2136 = vpop.f32.mrb[0].mxu0
    %v2137 = vadd.f32 %v1848, %v2136
    %v2138 = vpop.f32.mrb[0].mxu0
    %v2139 = vpop.f32.mrb[0].mxu0
    %v2140 = vadd.f32 %v1851, %v2139
    %v2141 = vpop.f32.mrb[0].mxu0
    %2142 = vmatprep.mubr.bf16.mxu0 %v666
    %2143 = vmatmul.mubr.bf16.gmra.mrb[0].mxu0 %v665
    %v2144 = vpop.f32.mrb[0].mxu0
    %v2145 = vadd.f32 %v1856, %v2144
    %v2146 = vpop.f32.mrb[0].mxu0
    %v2147 = vpop.f32.mrb[0].mxu0
    %v2148 = vadd.f32 %v1859, %v2147
    %v2149 = vpop.f32.mrb[0].mxu0
    %2150 = vmatprep.mubr.bf16.mxu0 %v670
    %2151 = vmatmul.mubr.bf16.gmra.mrb[0].mxu0 %v669
    %v2152 = vpop.f32.mrb[0].mxu0
    %v2153 = vadd.f32 %v1864, %v2152
    %v2154 = vpop.f32.mrb[0].mxu0
    %v2155 = vpop.f32.mrb[0].mxu0
    %v2156 = vadd.f32 %v1867, %v2155
    %v2157 = vpop.f32.mrb[0].mxu0
    %2158 = vmatprep.mubr.bf16.mxu0 %v674
    %2159 = vmatmul.mubr.bf16.gmra.mrb[0].mxu0 %v673
    %v2160 = vpop.f32.mrb[0].mxu0
    %v2161 = vadd.f32 %v1872, %v2160
    %v2162 = vpop.f32.mrb[0].mxu0
    %v2163 = vpop.f32.mrb[0].mxu0
    %v2164 = vadd.f32 %v1875, %v2163
    %v2165 = vpop.f32.mrb[0].mxu0
    %2166 = vmatprep.mubr.bf16.mxu0 %v678
    %2167 = vmatmul.mubr.bf16.gmra.mrb[0].mxu0 %v677
    %v2168 = vpop.f32.mrb[0].mxu0
    %v2169 = vadd.f32 %v1880, %v2168
    %v2170 = vpop.f32.mrb[0].mxu0
    %v2171 = vpop.f32.mrb[0].mxu0
    %v2172 = vadd.f32 %v1883, %v2171
    %v2173 = vpop.f32.mrb[0].mxu0
    %2174 = vmatprep.mubr.bf16.mxu0 %v682
    %2175 = vmatmul.mubr.bf16.gmra.mrb[0].mxu0 %v681
    %v2176 = vpop.f32.mrb[0].mxu0
    %v2177 = vadd.f32 %v1888, %v2176
    %v2178 = vpop.f32.mrb[0].mxu0
    %v2179 = vpop.f32.mrb[0].mxu0
    %v2180 = vadd.f32 %v1891, %v2179
    %v2181 = vpop.f32.mrb[0].mxu0
    %2182 = vmatprep.mubr.bf16.mxu0 %v686
    %2183 = vmatmul.mubr.bf16.gmra.mrb[0].mxu0 %v685
    %v2184 = vpop.f32.mrb[0].mxu0
    %v2185 = vadd.f32 %v1896, %v2184
    %v2186 = vpop.f32.mrb[0].mxu0
    %v2187 = vpop.f32.mrb[0].mxu0
    %v2188 = vadd.f32 %v1899, %v2187
    %v2189 = vpop.f32.mrb[0].mxu0
    %2190 = vmatprep.mubr.bf16.mxu0 %v690
    %2191 = vmatmul.mubr.bf16.gmra.mrb[0].mxu0 %v689
    %v2192 = vpop.f32.mrb[0].mxu0
    %v2193 = vadd.f32 %v1904, %v2192
    %v2194 = vpop.f32.mrb[0].mxu0
    %v2195 = vpop.f32.mrb[0].mxu0
    %v2196 = vadd.f32 %v1907, %v2195
    %v2197 = vpop.f32.mrb[0].mxu0
    %2198 = vmatprep.mubr.bf16.mxu0 %v694
    %2199 = vmatmul.mubr.bf16.gmra.mrb[0].mxu0 %v693
    %v2200 = vpop.f32.mrb[0].mxu0
    %v2201 = vadd.f32 %v1912, %v2200
    %v2202 = vpop.f32.mrb[0].mxu0
    %v2203 = vpop.f32.mrb[0].mxu0
    %v2204 = vadd.f32 %v1915, %v2203
    %v2205 = vpop.f32.mrb[0].mxu0
    %2206 = vmatprep.mubr.bf16.mxu0 %v698
    %2207 = vmatmul.mubr.bf16.gmra.mrb[0].mxu0 %v697
    %v2208 = vpop.f32.mrb[0].mxu0
    %v2209 = vadd.f32 %v1920, %v2208
    %v2210 = vpop.f32.mrb[0].mxu0
    %v2211 = vpop.f32.mrb[0].mxu0
    %v2212 = vadd.f32 %v1923, %v2211
    %v2213 = vpop.f32.mrb[0].mxu0
    %2214 = vmatprep.mubr.bf16.mxu0 %v702
    %2215 = vmatmul.mubr.bf16.gmra.mrb[0].mxu0 %v701
    %v2216 = vpop.f32.mrb[0].mxu0
    %v2217 = vadd.f32 %v1928, %v2216
    %v2218 = vpop.f32.mrb[0].mxu0
    %v2219 = vpop.f32.mrb[0].mxu0
    %v2220 = vadd.f32 %v1931, %v2219
    %v2221 = vpop.f32.mrb[0].mxu0
    %2222 = vmatprep.mubr.bf16.mxu0 %v706
    %2223 = vmatmul.mubr.bf16.gmra.mrb[0].mxu0 %v705
    %v2224 = vpop.f32.mrb[0].mxu0
    %v2225 = vadd.f32 %v1936, %v2224
    %v2226 = vpop.f32.mrb[0].mxu0
    %v2227 = vpop.f32.mrb[0].mxu0
    %v2228 = vadd.f32 %v1939, %v2227
    %v2229 = vpop.f32.mrb[0].mxu0
    %2230 = vmatprep.mubr.bf16.mxu0 %v710
    %2231 = vmatmul.mubr.bf16.gmra.mrb[0].mxu0 %v709
    %v2232 = vpop.f32.mrb[0].mxu0
    %v2233 = vadd.f32 %v1944, %v2232
    %v2234 = vpop.f32.mrb[0].mxu0
    %v2235 = vpop.f32.mrb[0].mxu0
    %v2236 = vadd.f32 %v1947, %v2235
    %v2237 = vpop.f32.mrb[0].mxu0
    %2238 = vmatprep.mubr.bf16.mxu0 %v714
    %2239 = vmatmul.mubr.bf16.gmra.mrb[0].mxu0 %v713
    %v2240 = vpop.f32.mrb[0].mxu0
    %v2241 = vadd.f32 %v1952, %v2240
    %v2242 = vpop.f32.mrb[0].mxu0
    %v2243 = vpop.f32.mrb[0].mxu0
    %v2244 = vadd.f32 %v1955, %v2243
    %v2245 = vpop.f32.mrb[0].mxu0
    %2246 = vmatprep.mubr.bf16.mxu0 %v718
    %2247 = vmatmul.mubr.bf16.gmra.mrb[0].mxu0 %v717
    %v2248 = vpop.f32.mrb[0].mxu0
    %v2249 = vadd.f32 %v1960, %v2248
    %v2250 = vpop.f32.mrb[0].mxu0
    %v2251 = vpop.f32.mrb[0].mxu0
    %v2252 = vadd.f32 %v1963, %v2251
    %v2253 = vpop.f32.mrb[0].mxu0
    %2254 = vmatprep.mubr.bf16.mxu0 %v722
    %2255 = vmatmul.mubr.bf16.gmra.mrb[0].mxu0 %v721
    %v2256 = vpop.f32.mrb[0].mxu0
    %v2257 = vadd.f32 %v1968, %v2256
    %v2258 = vpop.f32.mrb[0].mxu0
    %v2259 = vpop.f32.mrb[0].mxu0
    %v2260 = vadd.f32 %v1971, %v2259
    %v2261 = vpop.f32.mrb[0].mxu0
    %2262 = vmatprep.mubr.bf16.mxu0 %v726
    %2263 = vmatmul.mubr.bf16.gmra.mrb[0].mxu0 %v725
    %v2264 = vpop.f32.mrb[0].mxu0
    %v2265 = vadd.f32 %v1976, %v2264
    %v2266 = vpop.f32.mrb[0].mxu0
    %v2267 = vpop.f32.mrb[0].mxu0
    %v2268 = vadd.f32 %v1979, %v2267
    %v2269 = vpop.f32.mrb[0].mxu0
    %2270 = vmatprep.mubr.bf16.mxu0 %v730
    %2271 = vmatmul.mubr.bf16.gmra.mrb[0].mxu0 %v729
    %v2272 = vpop.f32.mrb[0].mxu0
    %v2273 = vadd.f32 %v1984, %v2272
    %v2274 = vpop.f32.mrb[0].mxu0
    %v2275 = vpop.f32.mrb[0].mxu0
    %v2276 = vadd.f32 %v1987, %v2275
    %v2277 = vpop.f32.mrb[0].mxu0
    %2278 = vmatprep.mubr.bf16.mxu0 %v734
    %2279 = vmatmul.mubr.bf16.gmra.mrb[0].mxu0 %v733
    %v2280 = vpop.f32.mrb[0].mxu0
    %v2281 = vadd.f32 %v1992, %v2280
    %v2282 = vpop.f32.mrb[0].mxu0
    %v2283 = vpop.f32.mrb[0].mxu0
    %v2284 = vadd.f32 %v1995, %v2283
    %v2285 = vpop.f32.mrb[0].mxu0
    %2286 = vmatprep.mubr.bf16.mxu0 %v738
    %2287 = vmatmul.mubr.bf16.gmra.mrb[0].mxu0 %v737
    %v2288 = vpop.f32.mrb[0].mxu0
    %v2289 = vadd.f32 %v2000, %v2288
    %v2290 = vpop.f32.mrb[0].mxu0
    %v2291 = vpop.f32.mrb[0].mxu0
    %v2292 = vadd.f32 %v2003, %v2291
    %v2293 = vpop.f32.mrb[0].mxu0
    %2294 = vmatprep.mubr.bf16.mxu0 %v742
    %2295 = vmatmul.mubr.bf16.gmra.mrb[0].mxu0 %v741
    %v2296 = vpop.f32.mrb[0].mxu0
    %v2297 = vadd.f32 %v2008, %v2296
    %v2298 = vpop.f32.mrb[0].mxu0
    %v2299 = vpop.f32.mrb[0].mxu0
    %v2300 = vadd.f32 %v2011, %v2299
    %v2301 = vpop.f32.mrb[0].mxu0
    %2302 = vmatprep.mubr.bf16.mxu0 %v746
    %2303 = vmatmul.mubr.bf16.gmra.mrb[0].mxu0 %v745
    %v2304 = vpop.f32.mrb[0].mxu0
    %v2305 = vadd.f32 %v2016, %v2304
    %v2306 = vpop.f32.mrb[0].mxu0
    %v2307 = vpop.f32.mrb[0].mxu0
    %v2308 = vadd.f32 %v2019, %v2307
    %v2309 = vpop.f32.mrb[0].mxu0
    %2310 = vmatprep.mubr.bf16.mxu0 %v750
    %2311 = vmatmul.mubr.bf16.gmra.mrb[0].mxu0 %v749
    %v2312 = vpop.f32.mrb[0].mxu0
    %v2313 = vadd.f32 %v2024, %v2312
    %v2314 = vpop.f32.mrb[0].mxu0
    %v2315 = vpop.f32.mrb[0].mxu0
    %v2316 = vadd.f32 %v2027, %v2315
    %v2317 = vpop.f32.mrb[0].mxu0
    %2318 = vmatprep.mubr.bf16.mxu0 %v754
    %2319 = vmatmul.mubr.bf16.gmra.mrb[0].mxu0 %v753
    %v2320 = vpop.f32.mrb[0].mxu0
    %v2321 = vadd.f32 %v2032, %v2320
    %v2322 = vpop.f32.mrb[0].mxu0
    %v2323 = vpop.f32.mrb[0].mxu0
    %v2324 = vadd.f32 %v2035, %v2323
    %v2325 = vpop.f32.mrb[0].mxu0
    %2326 = vdwg.mxu0
    %2327 = vst [vmem:[#allocation7] sm:$0xff] %v2073
    %2328 = vst [vmem:[#allocation7 + $0x8] sm:$0xff] %v2076
    %2329 = vst [vmem:[#allocation7 + $0x10] sm:$0xff] %v2081
    %2330 = vst [vmem:[#allocation7 + $0x18] sm:$0xff] %v2084
    %2331 = vst [vmem:[#allocation7 + $0x20] sm:$0xff] %v2089
    %2332 = vst [vmem:[#allocation7 + $0x28] sm:$0xff] %v2092
    %2333 = vst [vmem:[#allocation7 + $0x30] sm:$0xff] %v2097
    %2334 = vst [vmem:[#allocation7 + $0x38] sm:$0xff] %v2100
    %2335 = vst [vmem:[#allocation7 + $0x40] sm:$0xff] %v2105
    %2336 = vst [vmem:[#allocation7 + $0x48] sm:$0xff] %v2108
    %2337 = vst [vmem:[#allocation7 + $0x50] sm:$0xff] %v2113
    %2338 = vst [vmem:[#allocation7 + $0x58] sm:$0xff] %v2116
    %2339 = vst [vmem:[#allocation7 + $0x60] sm:$0xff] %v2121
    %2340 = vst [vmem:[#allocation7 + $0x68] sm:$0xff] %v2124
    %2341 = vst [vmem:[#allocation7 + $0x70] sm:$0xff] %v2129
    %2342 = vst [vmem:[#allocation7 + $0x78] sm:$0xff] %v2132
    %2343 = vst [vmem:[#allocation7 + $0x80] sm:$0xff] %v2137
    %2344 = vst [vmem:[#allocation7 + $0x88] sm:$0xff] %v2140
    %2345 = vst [vmem:[#allocation7 + $0x90] sm:$0xff] %v2145
    %2346 = vst [vmem:[#allocation7 + $0x98] sm:$0xff] %v2148
    %2347 = vst [vmem:[#allocation7 + $0xa0] sm:$0xff] %v2153
    %2348 = vst [vmem:[#allocation7 + $0xa8] sm:$0xff] %v2156
    %2349 = vst [vmem:[#allocation7 + $0xb0] sm:$0xff] %v2161
    %2350 = vst [vmem:[#allocation7 + $0xb8] sm:$0xff] %v2164
    %2351 = vst [vmem:[#allocation7 + $0xc0] sm:$0xff] %v2169
    %2352 = vst [vmem:[#allocation7 + $0xc8] sm:$0xff] %v2172
    %2353 = vst [vmem:[#allocation7 + $0xd0] sm:$0xff] %v2177
    %2354 = vst [vmem:[#allocation7 + $0xd8] sm:$0xff] %v2180
    %2355 = vst [vmem:[#allocation7 + $0xe0] sm:$0xff] %v2185
    %2356 = vst [vmem:[#allocation7 + $0xe8] sm:$0xff] %v2188
    %2357 = vst [vmem:[#allocation7 + $0xf0] sm:$0xff] %v2193
    %2358 = vst [vmem:[#allocation7 + $0xf8] sm:$0xff] %v2196
    %2359 = vst [vmem:[#allocation7 + $0x100] sm:$0xff] %v2201
    %2360 = vst [vmem:[#allocation7 + $0x108] sm:$0xff] %v2204
    %2361 = vst [vmem:[#allocation7 + $0x110] sm:$0xff] %v2209
    %2362 = vst [vmem:[#allocation7 + $0x118] sm:$0xff] %v2212
    %2363 = vst [vmem:[#allocation7 + $0x120] sm:$0xff] %v2217
    %2364 = vst [vmem:[#allocation7 + $0x128] sm:$0xff] %v2220
    %2365 = vst [vmem:[#allocation7 + $0x130] sm:$0xff] %v2225
    %2366 = vst [vmem:[#allocation7 + $0x138] sm:$0xff] %v2228
    %2367 = vst [vmem:[#allocation7 + $0x140] sm:$0xff] %v2233
    %2368 = vst [vmem:[#allocation7 + $0x148] sm:$0xff] %v2236
    %2369 = vst [vmem:[#allocation7 + $0x150] sm:$0xff] %v2241
    %2370 = vst [vmem:[#allocation7 + $0x158] sm:$0xff] %v2244
    %2371 = vst [vmem:[#allocation7 + $0x160] sm:$0xff] %v2249
    %2372 = vst [vmem:[#allocation7 + $0x168] sm:$0xff] %v2252
    %2373 = vst [vmem:[#allocation7 + $0x170] sm:$0xff] %v2257
    %2374 = vst [vmem:[#allocation7 + $0x178] sm:$0xff] %v2260
    %2375 = vst [vmem:[#allocation7 + $0x180] sm:$0xff] %v2265
    %2376 = vst [vmem:[#allocation7 + $0x188] sm:$0xff] %v2268
    %2377 = vst [vmem:[#allocation7 + $0x190] sm:$0xff] %v2273
    %2378 = vst [vmem:[#allocation7 + $0x198] sm:$0xff] %v2276
    %2379 = vst [vmem:[#allocation7 + $0x1a0] sm:$0xff] %v2281
    %2380 = vst [vmem:[#allocation7 + $0x1a8] sm:$0xff] %v2284
    %2381 = vst [vmem:[#allocation7 + $0x1b0] sm:$0xff] %v2289
    %2382 = vst [vmem:[#allocation7 + $0x1b8] sm:$0xff] %v2292
    %2383 = vst [vmem:[#allocation7 + $0x1c0] sm:$0xff] %v2297
    %2384 = vst [vmem:[#allocation7 + $0x1c8] sm:$0xff] %v2300
    %2385 = vst [vmem:[#allocation7 + $0x1d0] sm:$0xff] %v2305
    %2386 = vst [vmem:[#allocation7 + $0x1d8] sm:$0xff] %v2308
    %2387 = vst [vmem:[#allocation7 + $0x1e0] sm:$0xff] %v2313
    %2388 = vst [vmem:[#allocation7 + $0x1e8] sm:$0xff] %v2316
    %2389 = vst [vmem:[#allocation7 + $0x1f0] sm:$0xff] %v2321
    %2390 = vst [vmem:[#allocation7 + $0x1f8] sm:$0xff] %v2324
    // Predicated region
    $region22: #{tpu_custom_call.1} parent=1 // pred_check
      _
    $region23: #{tpu_custom_call.1} parent=1 // pred_check_branch
      %2392 = sbr.rel (0) target = $region25
    $region24: #{tpu_custom_call.1} parent=1 // pred_region
      %s2394 = ssub.s32 8192, 8192
      %2395 = vsyncadd [#allocation4], %s2394
      %s2396 = sshll.u32 [#allocation7], 4
      %s2397 = int_to_ptr.vmem [resolvable:$true] %s2396
      %2402 = dma.vmem_to_hbm [thread:$0]  %s2397, 8192, %s3, [#allocation4], 128, 128, 8
    $region25: #{tpu_custom_call.1} parent=1 // pred_fallthru
      _
    // Predicated region
    $region26: #{tpu_custom_call.1} parent=1 // pred_check
      _
    $region27: #{tpu_custom_call.1} parent=1 // pred_check_branch
      %2404 = sbr.rel (0) target = $region29
    $region28: #{tpu_custom_call.1} parent=1 // pred_region
      %2405 = dma.done [#allocation4], 8192
    $region29: #{tpu_custom_call.1} parent=1 // pred_fallthru
      _
    %2406 = vsyncpa [#allocation3], 1
    %2407 = vsyncpa [#allocation6], 1
    %2408 = vsyncpa [#allocation4], 1

</llo_original>
